<compile_context>
chip_gen: v7x
topology: tpu7x:2x2x1
jax: 0.10.0
libtpu: 0.0.40
codegen_flags: <defaults>
</compile_context>

<pallas_src>
import functools

import jax
import jax.numpy as jnp
from jax.experimental import pallas as pl


# ----------------------------- model config ---------------------------------
VOCAB_SIZE = 64
EMBED_DIM = 32
SEQ_LEN = 8
NUM_CLASSES = 4
NUM_HEADS = 4
HEAD_SIZE = EMBED_DIM // NUM_HEADS
FF_DIM = 4 * EMBED_DIM
LN_EPS = 1e-5
BATCH = 2


# ------------------------------ Pallas kernel --------------------------------
def encoder_kernel(
    ids_ref,    # (B*S, 1) int32 token ids
    tok_ref,    # (V, E)   token embedding table
    pos_ref,    # (S, E)   positional embedding table
    wq_ref,     # (E, E)   query proj, pre-transposed to [in, out]
    wk_ref,     # (E, E)
    wv_ref,     # (E, E)
    wo_ref,     # (E, E)   MHA output dense, [in, out]
    w1_ref,     # (E, 4E)  FFN first linear, [in, out]
    w2_ref,     # (4E, E)  FFN second linear, [in, out]
    wc_ref,     # (E, C)   classifier, [in, out]
    vec_ref,    # (8, 128) packed small params: bo,b1,b2,g1,be1,g2,be2,bc
    out_ref,    # (B, C)   logits
    *,
    num_heads: int,
    batch: int,
    seq_len: int,
):
    B, S, H = batch, seq_len, num_heads
    BS = B * S
    V, E = tok_ref.shape
    hs = E // H
    C = out_ref.shape[1]

    # ---- unpack small-parameter slab (rows of one (8,128) f32 tile) ----
    vecs = vec_ref[...]
    bo  = vecs[0:1, 0:E]
    b1  = vecs[1:2, :]            # (1, 4E) -- 4E == 128 fills the row exactly
    b2  = vecs[2:3, 0:E]
    g1  = vecs[3:4, 0:E]
    be1 = vecs[4:5, 0:E]
    g2  = vecs[5:6, 0:E]
    be2 = vecs[6:7, 0:E]
    bc  = vecs[7:8, 0:C]

    # ---- fused embedding lookup: one-hot matmul gather + positional add ----
    ids = ids_ref[...]                                                  # (BS, 1) int32
    vocab_iota = jax.lax.broadcasted_iota(jnp.int32, (BS, V), 1)
    onehot = (vocab_iota == ids).astype(jnp.float32)                    # (BS, V)
    x3 = jnp.dot(onehot, tok_ref[...],
                 preferred_element_type=jnp.float32).reshape(B, S, E)   # token embeds
    x3 = x3 + pos_ref[...][None, :, :]                                  # + position embeds
    x = x3.reshape(BS, E)                                               # (BS, E)

    inv_scale = 1.0 / jnp.sqrt(jnp.float32(E))   # matches reference: / embedding_dim**0.5

    # ---- multi-head self-attention (weights already [in, out] -> no .T) ----
    q = jnp.dot(x, wq_ref[...], preferred_element_type=jnp.float32).reshape(B, S, E)
    k = jnp.dot(x, wk_ref[...], preferred_element_type=jnp.float32).reshape(B, S, E)
    v = jnp.dot(x, wv_ref[...], preferred_element_type=jnp.float32).reshape(B, S, E)
    wo = wo_ref[...]                                                    # (E, E) [in, out]

    attn = jnp.zeros((BS, E), jnp.float32)
    for h in range(H):        # static unroll over heads; each head is batched over B
        lo = h * hs
        qh = q[:, :, lo:lo + hs]                                        # (B, S, hs)
        kh = k[:, :, lo:lo + hs]
        vh = v[:, :, lo:lo + hs]
        scores = jnp.einsum('bqd,bkd->bqk', qh, kh,
                            preferred_element_type=jnp.float32) * inv_scale
        scores = scores - jnp.max(scores, axis=-1, keepdims=True)
        p = jnp.exp(scores)
        p = p * pl.reciprocal(jnp.sum(p, axis=-1, keepdims=True))       # exact reciprocal
        oh = jnp.einsum('bqk,bkd->bqd', p, vh,
                        preferred_element_type=jnp.float32)             # (B, S, hs)
        # Project this head's output through its slice of the dense weight and
        # accumulate -- replaces the lane-axis concatenate of all heads.
        attn = attn + jnp.dot(oh.reshape(BS, hs), wo[lo:lo + hs, :],
                              preferred_element_type=jnp.float32)
    attn = attn + bo                                                    # (BS, E)

    # ---- residual + LayerNorm 1 ----
    y = x + attn
    mu = jnp.mean(y, axis=-1, keepdims=True)
    var = jnp.mean((y - mu) ** 2, axis=-1, keepdims=True)
    y = (y - mu) * jax.lax.rsqrt(var + LN_EPS) * g1 + be1

    # ---- feed-forward ----
    hidden = jnp.dot(y, w1_ref[...], preferred_element_type=jnp.float32) + b1
    hidden = jnp.maximum(hidden, 0.0)
    ff_out = jnp.dot(hidden, w2_ref[...], preferred_element_type=jnp.float32) + b2

    # ---- residual + LayerNorm 2 ----
    z = y + ff_out
    mu2 = jnp.mean(z, axis=-1, keepdims=True)
    var2 = jnp.mean((z - mu2) ** 2, axis=-1, keepdims=True)
    z = (z - mu2) * jax.lax.rsqrt(var2 + LN_EPS) * g2 + be2

    # ---- mean-pool over sequence as a tiny matmul (keeps the work on the MXU) ----
    row_idx = jax.lax.broadcasted_iota(jnp.int32, (B, BS), 0)
    col_idx = jax.lax.broadcasted_iota(jnp.int32, (B, BS), 1)
    in_segment = (col_idx >= row_idx * S) & (col_idx < (row_idx + 1) * S)
    pool = jnp.where(in_segment, 1.0 / S, 0.0)                          # (B, BS)
    pooled = jnp.dot(pool, z, preferred_element_type=jnp.float32)       # (B, E)

    # ---- classifier ----
    logits = jnp.dot(pooled, wc_ref[...], preferred_element_type=jnp.float32) + bc
    out_ref[...] = logits.astype(out_ref.dtype)                         # (B, C), single store


# ------------------------- one-time parameter packing ------------------------
def pack_params(params):
    """Pre-transpose weights to [in, out] and pack small vectors into one (8,128) slab."""
    E, C, F = EMBED_DIM, NUM_CLASSES, FF_DIM
    assert F <= 128 and C <= 128 and E <= 128, "slab packing assumes vectors fit in 128 lanes"
    vecs = jnp.zeros((8, 128), jnp.float32)
    vecs = vecs.at[0, :E].set(params["bo"])
    vecs = vecs.at[1, :F].set(params["b1"])
    vecs = vecs.at[2, :E].set(params["b2"])
    vecs = vecs.at[3, :E].set(params["g1"])
    vecs = vecs.at[4, :E].set(params["be1"])
    vecs = vecs.at[5, :E].set(params["g2"])
    vecs = vecs.at[6, :E].set(params["be2"])
    vecs = vecs.at[7, :C].set(params["bc"])
    return {
        "tok_emb": params["tok_emb"].astype(jnp.float32),
        "pos_emb": params["pos_emb"].astype(jnp.float32),
        "wq_t": params["wq"].T, "wk_t": params["wk"].T, "wv_t": params["wv"].T,
        "wo_t": params["wo"].T,
        "w1_t": params["w1"].T, "w2_t": params["w2"].T,
        "wc_t": params["wc"].T,
        "vecs": vecs,
    }


# ------------------------------ wrapper --------------------------------------
@jax.jit
def encoder_transformer_pallas(input_ids, kp):
    """input_ids: (B, S) int32; kp: output of pack_params. Returns (B, num_classes) f32."""
    B, S = input_ids.shape
    ids_col = input_ids.reshape(B * S, 1).astype(jnp.int32)
    kernel = functools.partial(encoder_kernel, num_heads=NUM_HEADS, batch=B, seq_len=S)
    # Single invocation, no grid: every operand fits comfortably in VMEM (< 100 KiB total),
    # so whole arrays are mapped with the default (full-array) BlockSpecs.
    return pl.pallas_call(
        kernel,
        out_shape=jax.ShapeDtypeStruct((B, NUM_CLASSES), jnp.float32),
    )(ids_col, kp["tok_emb"], kp["pos_emb"],
      kp["wq_t"], kp["wk_t"], kp["wv_t"], kp["wo_t"],
      kp["w1_t"], kp["w2_t"], kp["wc_t"], kp["vecs"])


# ------------------------- pure-JAX reference --------------------------------
def encoder_transformer_ref(input_ids, params):
    B, S = input_ids.shape
    E = EMBED_DIM
    tok_emb = jnp.take(params["tok_emb"], input_ids, axis=0)
    pos_emb = params["pos_emb"][jnp.arange(S)][None, :, :]
    x = (tok_emb + pos_emb).astype(jnp.float32)

    q = x @ params["wq"].T
    k = x @ params["wk"].T
    v = x @ params["wv"].T
    hs = E // NUM_HEADS
    outs = []
    for h in range(NUM_HEADS):
        lo, hi = h * hs, (h + 1) * hs
        s = (q[..., lo:hi] @ jnp.swapaxes(k[..., lo:hi], -1, -2)) / jnp.sqrt(jnp.float32(E))
        p = jax.nn.softmax(s, axis=-1)
        outs.append(p @ v[..., lo:hi])
    attn = jnp.concatenate(outs, axis=-1) @ params["wo"].T + params["bo"]

    def ln(t, g, b):
        mu = t.mean(-1, keepdims=True)
        var = ((t - mu) ** 2).mean(-1, keepdims=True)
        return (t - mu) * jax.lax.rsqrt(var + LN_EPS) * g + b

    y = ln(x + attn, params["g1"], params["be1"])
    ff = jnp.maximum(y @ params["w1"].T + params["b1"], 0.0) @ params["w2"].T + params["b2"]
    z = ln(y + ff, params["g2"], params["be2"])
    pooled = z.mean(axis=1)
    return pooled @ params["wc"].T + params["bc"]


# ------------------------------- main -----------------------------------------
def make_params(key):
    ks = jax.random.split(key, 16)
    E, C = EMBED_DIM, NUM_CLASSES

    def init(k, shape, scale):
        return jax.random.normal(k, shape, jnp.float32) * scale

    return {
        "tok_emb": init(ks[0], (VOCAB_SIZE, E), 0.02),
        "pos_emb": init(ks[1], (SEQ_LEN, E), 0.02),
        # per-head K/Q/V (no bias) concatenated along out dim -> (E, E), torch [out, in]
        "wq": init(ks[2], (E, E), E ** -0.5),
        "wk": init(ks[3], (E, E), E ** -0.5),
        "wv": init(ks[4], (E, E), E ** -0.5),
        "wo": init(ks[5], (E, E), E ** -0.5),
        "bo": init(ks[6], (E,), 0.01),
        "w1": init(ks[7], (FF_DIM, E), E ** -0.5),
        "b1": init(ks[8], (FF_DIM,), 0.01),
        "w2": init(ks[9], (E, FF_DIM), FF_DIM ** -0.5),
        "b2": init(ks[10], (E,), 0.01),
        "g1": jnp.ones((E,), jnp.float32),
        "be1": jnp.zeros((E,), jnp.float32),
        "g2": jnp.ones((E,), jnp.float32),
        "be2": jnp.zeros((E,), jnp.float32),
        "wc": init(ks[11], (C, E), E ** -0.5),
        "bc": init(ks[12], (C,), 0.01),
    }


if __name__ == "__main__":
    key = jax.random.PRNGKey(0)
    pkey, ikey = jax.random.split(key)
    params = make_params(pkey)
    input_ids = jax.random.randint(ikey, (BATCH, SEQ_LEN), 0, VOCAB_SIZE, dtype=jnp.int32)

    kparams = pack_params(params)                      # one-time host-side weight prep
    logits = encoder_transformer_pallas(input_ids, kparams)
    logits = jax.block_until_ready(logits)

    ref = encoder_transformer_ref(input_ids, params)
    assert logits.shape == (BATCH, NUM_CLASSES)
    assert jnp.allclose(logits, ref, atol=2e-4, rtol=2e-4), (logits, ref)

    print("KERNEL_OK")
</pallas_src>

<mosaic_0001>
module attributes {stable_mosaic.version = 11 : i64} {
  func.func @encoder_kernel(%arg0: memref<16x1xi32, #tpu.memory_space<vmem>>, %arg1: memref<64x32xf32, #tpu.memory_space<vmem>>, %arg2: memref<8x32xf32, #tpu.memory_space<vmem>>, %arg3: memref<32x32xf32, #tpu.memory_space<vmem>>, %arg4: memref<32x32xf32, #tpu.memory_space<vmem>>, %arg5: memref<32x32xf32, #tpu.memory_space<vmem>>, %arg6: memref<32x32xf32, #tpu.memory_space<vmem>>, %arg7: memref<32x128xf32, #tpu.memory_space<vmem>>, %arg8: memref<128x32xf32, #tpu.memory_space<vmem>>, %arg9: memref<32x4xf32, #tpu.memory_space<vmem>>, %arg10: memref<8x128xf32, #tpu.memory_space<vmem>>, %arg11: memref<2x4xf32, #tpu.memory_space<vmem>>) attributes {dimension_semantics = [], scalar_prefetch = 0 : i64, scratch_operands = 0 : i64, tpu.core_type = #tpu.core_type<tc>} {
    %c0 = arith.constant 0 : index
    %c0_0 = arith.constant 0 : index
    %0 = vector.load %arg10[%c0, %c0_0] : memref<8x128xf32, #tpu.memory_space<vmem>>, vector<8x128xf32>
    %1 = vector.extract_strided_slice %0 {offsets = [0, 0], sizes = [1, 32], strides = [1, 1]} : vector<8x128xf32> to vector<1x32xf32>
    %2 = vector.extract_strided_slice %0 {offsets = [1, 0], sizes = [1, 128], strides = [1, 1]} : vector<8x128xf32> to vector<1x128xf32>
    %3 = vector.extract_strided_slice %0 {offsets = [2, 0], sizes = [1, 32], strides = [1, 1]} : vector<8x128xf32> to vector<1x32xf32>
    %4 = vector.extract_strided_slice %0 {offsets = [3, 0], sizes = [1, 32], strides = [1, 1]} : vector<8x128xf32> to vector<1x32xf32>
    %5 = vector.extract_strided_slice %0 {offsets = [4, 0], sizes = [1, 32], strides = [1, 1]} : vector<8x128xf32> to vector<1x32xf32>
    %6 = vector.extract_strided_slice %0 {offsets = [5, 0], sizes = [1, 32], strides = [1, 1]} : vector<8x128xf32> to vector<1x32xf32>
    %7 = vector.extract_strided_slice %0 {offsets = [6, 0], sizes = [1, 32], strides = [1, 1]} : vector<8x128xf32> to vector<1x32xf32>
    %8 = vector.extract_strided_slice %0 {offsets = [7, 0], sizes = [1, 4], strides = [1, 1]} : vector<8x128xf32> to vector<1x4xf32>
    %c0_1 = arith.constant 0 : index
    %c0_2 = arith.constant 0 : index
    %9 = vector.load %arg0[%c0_1, %c0_2] : memref<16x1xi32, #tpu.memory_space<vmem>>, vector<16x1xi32>
    %10 = tpu.iota {dimensions = array<i32: 1>} : vector<16x64xi32>
    %11 = vector.broadcast %9 : vector<16x1xi32> to vector<16x64xi32>
    %12 = arith.cmpi eq, %10, %11 : vector<16x64xi32>
    %13 = arith.extui %12 : vector<16x64xi1> to vector<16x64xi32>
    %14 = arith.sitofp %13 : vector<16x64xi32> to vector<16x64xf32>
    %c0_3 = arith.constant 0 : index
    %c0_4 = arith.constant 0 : index
    %15 = vector.load %arg1[%c0_3, %c0_4] : memref<64x32xf32, #tpu.memory_space<vmem>>, vector<64x32xf32>
    %cst = arith.constant dense<0.000000e+00> : vector<16x32xf32>
    %16 = tpu.matmul %14, %15, %cst {dimension_numbers = #tpu.dot_dimension_numbers<[1], [0], [0], [1], [0, 0, 1, 1], [], []>} : vector<16x64xf32>, vector<64x32xf32>, vector<16x32xf32> -> vector<16x32xf32>
    %17 = vector.shape_cast %16 : vector<16x32xf32> to vector<2x8x32xf32>
    %c0_5 = arith.constant 0 : index
    %c0_6 = arith.constant 0 : index
    %18 = vector.load %arg2[%c0_5, %c0_6] : memref<8x32xf32, #tpu.memory_space<vmem>>, vector<8x32xf32>
    %19 = vector.shape_cast %18 : vector<8x32xf32> to vector<1x8x32xf32>
    %20 = vector.broadcast %19 : vector<1x8x32xf32> to vector<2x8x32xf32>
    %21 = arith.addf %17, %20 : vector<2x8x32xf32>
    %22 = vector.shape_cast %21 : vector<2x8x32xf32> to vector<16x32xf32>
    %cst_7 = arith.constant 3.200000e+01 : f32
    %23 = math.sqrt %cst_7 : f32
    %cst_8 = arith.constant 1.000000e+00 : f32
    %24 = arith.divf %cst_8, %23 : f32
    %c0_9 = arith.constant 0 : index
    %c0_10 = arith.constant 0 : index
    %25 = vector.load %arg3[%c0_9, %c0_10] : memref<32x32xf32, #tpu.memory_space<vmem>>, vector<32x32xf32>
    %cst_11 = arith.constant dense<0.000000e+00> : vector<16x32xf32>
    %26 = tpu.matmul %22, %25, %cst_11 {dimension_numbers = #tpu.dot_dimension_numbers<[1], [0], [0], [1], [0, 0, 1, 1], [], []>} : vector<16x32xf32>, vector<32x32xf32>, vector<16x32xf32> -> vector<16x32xf32>
    %27 = vector.shape_cast %26 : vector<16x32xf32> to vector<2x8x32xf32>
    %c0_12 = arith.constant 0 : index
    %c0_13 = arith.constant 0 : index
    %28 = vector.load %arg4[%c0_12, %c0_13] : memref<32x32xf32, #tpu.memory_space<vmem>>, vector<32x32xf32>
    %cst_14 = arith.constant dense<0.000000e+00> : vector<16x32xf32>
    %29 = tpu.matmul %22, %28, %cst_14 {dimension_numbers = #tpu.dot_dimension_numbers<[1], [0], [0], [1], [0, 0, 1, 1], [], []>} : vector<16x32xf32>, vector<32x32xf32>, vector<16x32xf32> -> vector<16x32xf32>
    %30 = vector.shape_cast %29 : vector<16x32xf32> to vector<2x8x32xf32>
    %c0_15 = arith.constant 0 : index
    %c0_16 = arith.constant 0 : index
    %31 = vector.load %arg5[%c0_15, %c0_16] : memref<32x32xf32, #tpu.memory_space<vmem>>, vector<32x32xf32>
    %cst_17 = arith.constant dense<0.000000e+00> : vector<16x32xf32>
    %32 = tpu.matmul %22, %31, %cst_17 {dimension_numbers = #tpu.dot_dimension_numbers<[1], [0], [0], [1], [0, 0, 1, 1], [], []>} : vector<16x32xf32>, vector<32x32xf32>, vector<16x32xf32> -> vector<16x32xf32>
    %33 = vector.shape_cast %32 : vector<16x32xf32> to vector<2x8x32xf32>
    %c0_18 = arith.constant 0 : index
    %c0_19 = arith.constant 0 : index
    %34 = vector.load %arg6[%c0_18, %c0_19] : memref<32x32xf32, #tpu.memory_space<vmem>>, vector<32x32xf32>
    %cst_20 = arith.constant 0.000000e+00 : f32
    %35 = vector.broadcast %cst_20 : f32 to vector<16x32xf32>
    %36 = vector.extract_strided_slice %27 {offsets = [0, 0, 0], sizes = [2, 8, 8], strides = [1, 1, 1]} : vector<2x8x32xf32> to vector<2x8x8xf32>
    %37 = vector.extract_strided_slice %30 {offsets = [0, 0, 0], sizes = [2, 8, 8], strides = [1, 1, 1]} : vector<2x8x32xf32> to vector<2x8x8xf32>
    %38 = vector.extract_strided_slice %33 {offsets = [0, 0, 0], sizes = [2, 8, 8], strides = [1, 1, 1]} : vector<2x8x32xf32> to vector<2x8x8xf32>
    "tpu.trace_start"() <{level = 10 : i32, message = "bqd,bkd->bqk"}> : () -> ()
    %cst_21 = arith.constant dense<0.000000e+00> : vector<2x8x8xf32>
    %39 = tpu.matmul %36, %37, %cst_21 {dimension_numbers = #tpu.dot_dimension_numbers<[2], [2], [1], [1], [0, 0, 0, 1, 1, 1], [0], [0]>} : vector<2x8x8xf32>, vector<2x8x8xf32>, vector<2x8x8xf32> -> vector<2x8x8xf32>
    "tpu.trace_stop"() : () -> ()
    %40 = vector.broadcast %24 : f32 to vector<2x8x8xf32>
    %41 = arith.mulf %39, %40 : vector<2x8x8xf32>
    %cst_22 = arith.constant dense<0xFF800000> : vector<2x8xf32>
    %42 = vector.multi_reduction <maximumf>, %41, %cst_22 [2] : vector<2x8x8xf32> to vector<2x8xf32>
    %43 = vector.shape_cast %42 : vector<2x8xf32> to vector<2x8x1xf32>
    %44 = vector.broadcast %43 : vector<2x8x1xf32> to vector<2x8x8xf32>
    %45 = arith.subf %41, %44 : vector<2x8x8xf32>
    %46 = math.exp %45 : vector<2x8x8xf32>
    %cst_23 = arith.constant dense<0.000000e+00> : vector<2x8xf32>
    %47 = vector.multi_reduction <add>, %46, %cst_23 [2] : vector<2x8x8xf32> to vector<2x8xf32>
    %48 = vector.shape_cast %47 : vector<2x8xf32> to vector<2x8x1xf32>
    %49 = tpu.reciprocal %48 : vector<2x8x1xf32> -> vector<2x8x1xf32>
    %50 = vector.broadcast %49 : vector<2x8x1xf32> to vector<2x8x8xf32>
    %51 = arith.mulf %46, %50 : vector<2x8x8xf32>
    "tpu.trace_start"() <{level = 10 : i32, message = "bqk,bkd->bqd"}> : () -> ()
    %cst_24 = arith.constant dense<0.000000e+00> : vector<2x8x8xf32>
    %52 = tpu.matmul %51, %38, %cst_24 {dimension_numbers = #tpu.dot_dimension_numbers<[2], [1], [1], [2], [0, 0, 0, 1, 1, 2], [0], [0]>} : vector<2x8x8xf32>, vector<2x8x8xf32>, vector<2x8x8xf32> -> vector<2x8x8xf32>
    "tpu.trace_stop"() : () -> ()
    %53 = vector.shape_cast %52 : vector<2x8x8xf32> to vector<16x8xf32>
    %54 = vector.extract_strided_slice %34 {offsets = [0, 0], sizes = [8, 32], strides = [1, 1]} : vector<32x32xf32> to vector<8x32xf32>
    %cst_25 = arith.constant dense<0.000000e+00> : vector<16x32xf32>
    %55 = tpu.matmul %53, %54, %cst_25 {dimension_numbers = #tpu.dot_dimension_numbers<[1], [0], [0], [1], [0, 0, 1, 1], [], []>} : vector<16x8xf32>, vector<8x32xf32>, vector<16x32xf32> -> vector<16x32xf32>
    %56 = arith.addf %35, %55 : vector<16x32xf32>
    %57 = vector.extract_strided_slice %27 {offsets = [0, 0, 8], sizes = [2, 8, 8], strides = [1, 1, 1]} : vector<2x8x32xf32> to vector<2x8x8xf32>
    %58 = vector.extract_strided_slice %30 {offsets = [0, 0, 8], sizes = [2, 8, 8], strides = [1, 1, 1]} : vector<2x8x32xf32> to vector<2x8x8xf32>
    %59 = vector.extract_strided_slice %33 {offsets = [0, 0, 8], sizes = [2, 8, 8], strides = [1, 1, 1]} : vector<2x8x32xf32> to vector<2x8x8xf32>
    "tpu.trace_start"() <{level = 10 : i32, message = "bqd,bkd->bqk"}> : () -> ()
    %cst_26 = arith.constant dense<0.000000e+00> : vector<2x8x8xf32>
    %60 = tpu.matmul %57, %58, %cst_26 {dimension_numbers = #tpu.dot_dimension_numbers<[2], [2], [1], [1], [0, 0, 0, 1, 1, 1], [0], [0]>} : vector<2x8x8xf32>, vector<2x8x8xf32>, vector<2x8x8xf32> -> vector<2x8x8xf32>
    "tpu.trace_stop"() : () -> ()
    %61 = vector.broadcast %24 : f32 to vector<2x8x8xf32>
    %62 = arith.mulf %60, %61 : vector<2x8x8xf32>
    %cst_27 = arith.constant dense<0xFF800000> : vector<2x8xf32>
    %63 = vector.multi_reduction <maximumf>, %62, %cst_27 [2] : vector<2x8x8xf32> to vector<2x8xf32>
    %64 = vector.shape_cast %63 : vector<2x8xf32> to vector<2x8x1xf32>
    %65 = vector.broadcast %64 : vector<2x8x1xf32> to vector<2x8x8xf32>
    %66 = arith.subf %62, %65 : vector<2x8x8xf32>
    %67 = math.exp %66 : vector<2x8x8xf32>
    %cst_28 = arith.constant dense<0.000000e+00> : vector<2x8xf32>
    %68 = vector.multi_reduction <add>, %67, %cst_28 [2] : vector<2x8x8xf32> to vector<2x8xf32>
    %69 = vector.shape_cast %68 : vector<2x8xf32> to vector<2x8x1xf32>
    %70 = tpu.reciprocal %69 : vector<2x8x1xf32> -> vector<2x8x1xf32>
    %71 = vector.broadcast %70 : vector<2x8x1xf32> to vector<2x8x8xf32>
    %72 = arith.mulf %67, %71 : vector<2x8x8xf32>
    "tpu.trace_start"() <{level = 10 : i32, message = "bqk,bkd->bqd"}> : () -> ()
    %cst_29 = arith.constant dense<0.000000e+00> : vector<2x8x8xf32>
    %73 = tpu.matmul %72, %59, %cst_29 {dimension_numbers = #tpu.dot_dimension_numbers<[2], [1], [1], [2], [0, 0, 0, 1, 1, 2], [0], [0]>} : vector<2x8x8xf32>, vector<2x8x8xf32>, vector<2x8x8xf32> -> vector<2x8x8xf32>
    "tpu.trace_stop"() : () -> ()
    %74 = vector.shape_cast %73 : vector<2x8x8xf32> to vector<16x8xf32>
    %75 = vector.extract_strided_slice %34 {offsets = [8, 0], sizes = [8, 32], strides = [1, 1]} : vector<32x32xf32> to vector<8x32xf32>
    %cst_30 = arith.constant dense<0.000000e+00> : vector<16x32xf32>
    %76 = tpu.matmul %74, %75, %cst_30 {dimension_numbers = #tpu.dot_dimension_numbers<[1], [0], [0], [1], [0, 0, 1, 1], [], []>} : vector<16x8xf32>, vector<8x32xf32>, vector<16x32xf32> -> vector<16x32xf32>
    %77 = arith.addf %56, %76 : vector<16x32xf32>
    %78 = vector.extract_strided_slice %27 {offsets = [0, 0, 16], sizes = [2, 8, 8], strides = [1, 1, 1]} : vector<2x8x32xf32> to vector<2x8x8xf32>
    %79 = vector.extract_strided_slice %30 {offsets = [0, 0, 16], sizes = [2, 8, 8], strides = [1, 1, 1]} : vector<2x8x32xf32> to vector<2x8x8xf32>
    %80 = vector.extract_strided_slice %33 {offsets = [0, 0, 16], sizes = [2, 8, 8], strides = [1, 1, 1]} : vector<2x8x32xf32> to vector<2x8x8xf32>
    "tpu.trace_start"() <{level = 10 : i32, message = "bqd,bkd->bqk"}> : () -> ()
    %cst_31 = arith.constant dense<0.000000e+00> : vector<2x8x8xf32>
    %81 = tpu.matmul %78, %79, %cst_31 {dimension_numbers = #tpu.dot_dimension_numbers<[2], [2], [1], [1], [0, 0, 0, 1, 1, 1], [0], [0]>} : vector<2x8x8xf32>, vector<2x8x8xf32>, vector<2x8x8xf32> -> vector<2x8x8xf32>
    "tpu.trace_stop"() : () -> ()
    %82 = vector.broadcast %24 : f32 to vector<2x8x8xf32>
    %83 = arith.mulf %81, %82 : vector<2x8x8xf32>
    %cst_32 = arith.constant dense<0xFF800000> : vector<2x8xf32>
    %84 = vector.multi_reduction <maximumf>, %83, %cst_32 [2] : vector<2x8x8xf32> to vector<2x8xf32>
    %85 = vector.shape_cast %84 : vector<2x8xf32> to vector<2x8x1xf32>
    %86 = vector.broadcast %85 : vector<2x8x1xf32> to vector<2x8x8xf32>
    %87 = arith.subf %83, %86 : vector<2x8x8xf32>
    %88 = math.exp %87 : vector<2x8x8xf32>
    %cst_33 = arith.constant dense<0.000000e+00> : vector<2x8xf32>
    %89 = vector.multi_reduction <add>, %88, %cst_33 [2] : vector<2x8x8xf32> to vector<2x8xf32>
    %90 = vector.shape_cast %89 : vector<2x8xf32> to vector<2x8x1xf32>
    %91 = tpu.reciprocal %90 : vector<2x8x1xf32> -> vector<2x8x1xf32>
    %92 = vector.broadcast %91 : vector<2x8x1xf32> to vector<2x8x8xf32>
    %93 = arith.mulf %88, %92 : vector<2x8x8xf32>
    "tpu.trace_start"() <{level = 10 : i32, message = "bqk,bkd->bqd"}> : () -> ()
    %cst_34 = arith.constant dense<0.000000e+00> : vector<2x8x8xf32>
    %94 = tpu.matmul %93, %80, %cst_34 {dimension_numbers = #tpu.dot_dimension_numbers<[2], [1], [1], [2], [0, 0, 0, 1, 1, 2], [0], [0]>} : vector<2x8x8xf32>, vector<2x8x8xf32>, vector<2x8x8xf32> -> vector<2x8x8xf32>
    "tpu.trace_stop"() : () -> ()
    %95 = vector.shape_cast %94 : vector<2x8x8xf32> to vector<16x8xf32>
    %96 = vector.extract_strided_slice %34 {offsets = [16, 0], sizes = [8, 32], strides = [1, 1]} : vector<32x32xf32> to vector<8x32xf32>
    %cst_35 = arith.constant dense<0.000000e+00> : vector<16x32xf32>
    %97 = tpu.matmul %95, %96, %cst_35 {dimension_numbers = #tpu.dot_dimension_numbers<[1], [0], [0], [1], [0, 0, 1, 1], [], []>} : vector<16x8xf32>, vector<8x32xf32>, vector<16x32xf32> -> vector<16x32xf32>
    %98 = arith.addf %77, %97 : vector<16x32xf32>
    %99 = vector.extract_strided_slice %27 {offsets = [0, 0, 24], sizes = [2, 8, 8], strides = [1, 1, 1]} : vector<2x8x32xf32> to vector<2x8x8xf32>
    %100 = vector.extract_strided_slice %30 {offsets = [0, 0, 24], sizes = [2, 8, 8], strides = [1, 1, 1]} : vector<2x8x32xf32> to vector<2x8x8xf32>
    %101 = vector.extract_strided_slice %33 {offsets = [0, 0, 24], sizes = [2, 8, 8], strides = [1, 1, 1]} : vector<2x8x32xf32> to vector<2x8x8xf32>
    "tpu.trace_start"() <{level = 10 : i32, message = "bqd,bkd->bqk"}> : () -> ()
    %cst_36 = arith.constant dense<0.000000e+00> : vector<2x8x8xf32>
    %102 = tpu.matmul %99, %100, %cst_36 {dimension_numbers = #tpu.dot_dimension_numbers<[2], [2], [1], [1], [0, 0, 0, 1, 1, 1], [0], [0]>} : vector<2x8x8xf32>, vector<2x8x8xf32>, vector<2x8x8xf32> -> vector<2x8x8xf32>
    "tpu.trace_stop"() : () -> ()
    %103 = vector.broadcast %24 : f32 to vector<2x8x8xf32>
    %104 = arith.mulf %102, %103 : vector<2x8x8xf32>
    %cst_37 = arith.constant dense<0xFF800000> : vector<2x8xf32>
    %105 = vector.multi_reduction <maximumf>, %104, %cst_37 [2] : vector<2x8x8xf32> to vector<2x8xf32>
    %106 = vector.shape_cast %105 : vector<2x8xf32> to vector<2x8x1xf32>
    %107 = vector.broadcast %106 : vector<2x8x1xf32> to vector<2x8x8xf32>
    %108 = arith.subf %104, %107 : vector<2x8x8xf32>
    %109 = math.exp %108 : vector<2x8x8xf32>
    %cst_38 = arith.constant dense<0.000000e+00> : vector<2x8xf32>
    %110 = vector.multi_reduction <add>, %109, %cst_38 [2] : vector<2x8x8xf32> to vector<2x8xf32>
    %111 = vector.shape_cast %110 : vector<2x8xf32> to vector<2x8x1xf32>
    %112 = tpu.reciprocal %111 : vector<2x8x1xf32> -> vector<2x8x1xf32>
    %113 = vector.broadcast %112 : vector<2x8x1xf32> to vector<2x8x8xf32>
    %114 = arith.mulf %109, %113 : vector<2x8x8xf32>
    "tpu.trace_start"() <{level = 10 : i32, message = "bqk,bkd->bqd"}> : () -> ()
    %cst_39 = arith.constant dense<0.000000e+00> : vector<2x8x8xf32>
    %115 = tpu.matmul %114, %101, %cst_39 {dimension_numbers = #tpu.dot_dimension_numbers<[2], [1], [1], [2], [0, 0, 0, 1, 1, 2], [0], [0]>} : vector<2x8x8xf32>, vector<2x8x8xf32>, vector<2x8x8xf32> -> vector<2x8x8xf32>
    "tpu.trace_stop"() : () -> ()
    %116 = vector.shape_cast %115 : vector<2x8x8xf32> to vector<16x8xf32>
    %117 = vector.extract_strided_slice %34 {offsets = [24, 0], sizes = [8, 32], strides = [1, 1]} : vector<32x32xf32> to vector<8x32xf32>
    %cst_40 = arith.constant dense<0.000000e+00> : vector<16x32xf32>
    %118 = tpu.matmul %116, %117, %cst_40 {dimension_numbers = #tpu.dot_dimension_numbers<[1], [0], [0], [1], [0, 0, 1, 1], [], []>} : vector<16x8xf32>, vector<8x32xf32>, vector<16x32xf32> -> vector<16x32xf32>
    %119 = arith.addf %98, %118 : vector<16x32xf32>
    %120 = vector.broadcast %1 : vector<1x32xf32> to vector<16x32xf32>
    %121 = arith.addf %119, %120 : vector<16x32xf32>
    %122 = arith.addf %22, %121 : vector<16x32xf32>
    %cst_41 = arith.constant dense<0.000000e+00> : vector<16xf32>
    %123 = vector.multi_reduction <add>, %122, %cst_41 [1] : vector<16x32xf32> to vector<16xf32>
    %124 = vector.shape_cast %123 : vector<16xf32> to vector<16x1xf32>
    %cst_42 = arith.constant 3.200000e+01 : f32
    %125 = vector.broadcast %cst_42 : f32 to vector<16x1xf32>
    %126 = arith.divf %124, %125 : vector<16x1xf32>
    %127 = vector.broadcast %126 : vector<16x1xf32> to vector<16x32xf32>
    %128 = arith.subf %122, %127 : vector<16x32xf32>
    %129 = arith.mulf %128, %128 : vector<16x32xf32>
    %cst_43 = arith.constant dense<0.000000e+00> : vector<16xf32>
    %130 = vector.multi_reduction <add>, %129, %cst_43 [1] : vector<16x32xf32> to vector<16xf32>
    %131 = vector.shape_cast %130 : vector<16xf32> to vector<16x1xf32>
    %cst_44 = arith.constant 3.200000e+01 : f32
    %132 = vector.broadcast %cst_44 : f32 to vector<16x1xf32>
    %133 = arith.divf %131, %132 : vector<16x1xf32>
    %134 = vector.broadcast %126 : vector<16x1xf32> to vector<16x32xf32>
    %135 = arith.subf %122, %134 : vector<16x32xf32>
    %cst_45 = arith.constant 9.99999974E-6 : f32
    %136 = vector.broadcast %cst_45 : f32 to vector<16x1xf32>
    %137 = arith.addf %133, %136 : vector<16x1xf32>
    %138 = math.rsqrt %137 : vector<16x1xf32>
    %139 = vector.broadcast %138 : vector<16x1xf32> to vector<16x32xf32>
    %140 = arith.mulf %135, %139 : vector<16x32xf32>
    %141 = vector.broadcast %4 : vector<1x32xf32> to vector<16x32xf32>
    %142 = arith.mulf %140, %141 : vector<16x32xf32>
    %143 = vector.broadcast %5 : vector<1x32xf32> to vector<16x32xf32>
    %144 = arith.addf %142, %143 : vector<16x32xf32>
    %c0_46 = arith.constant 0 : index
    %c0_47 = arith.constant 0 : index
    %145 = vector.load %arg7[%c0_46, %c0_47] : memref<32x128xf32, #tpu.memory_space<vmem>>, vector<32x128xf32>
    %cst_48 = arith.constant dense<0.000000e+00> : vector<16x128xf32>
    %146 = tpu.matmul %144, %145, %cst_48 {dimension_numbers = #tpu.dot_dimension_numbers<[1], [0], [0], [1], [0, 0, 1, 1], [], []>} : vector<16x32xf32>, vector<32x128xf32>, vector<16x128xf32> -> vector<16x128xf32>
    %147 = vector.broadcast %2 : vector<1x128xf32> to vector<16x128xf32>
    %148 = arith.addf %146, %147 : vector<16x128xf32>
    %cst_49 = arith.constant 0.000000e+00 : f32
    %149 = vector.broadcast %cst_49 : f32 to vector<16x128xf32>
    %150 = arith.maximumf %148, %149 : vector<16x128xf32>
    %c0_50 = arith.constant 0 : index
    %c0_51 = arith.constant 0 : index
    %151 = vector.load %arg8[%c0_50, %c0_51] : memref<128x32xf32, #tpu.memory_space<vmem>>, vector<128x32xf32>
    %cst_52 = arith.constant dense<0.000000e+00> : vector<16x32xf32>
    %152 = tpu.matmul %150, %151, %cst_52 {dimension_numbers = #tpu.dot_dimension_numbers<[1], [0], [0], [1], [0, 0, 1, 1], [], []>} : vector<16x128xf32>, vector<128x32xf32>, vector<16x32xf32> -> vector<16x32xf32>
    %153 = vector.broadcast %3 : vector<1x32xf32> to vector<16x32xf32>
    %154 = arith.addf %152, %153 : vector<16x32xf32>
    %155 = arith.addf %144, %154 : vector<16x32xf32>
    %cst_53 = arith.constant dense<0.000000e+00> : vector<16xf32>
    %156 = vector.multi_reduction <add>, %155, %cst_53 [1] : vector<16x32xf32> to vector<16xf32>
    %157 = vector.shape_cast %156 : vector<16xf32> to vector<16x1xf32>
    %cst_54 = arith.constant 3.200000e+01 : f32
    %158 = vector.broadcast %cst_54 : f32 to vector<16x1xf32>
    %159 = arith.divf %157, %158 : vector<16x1xf32>
    %160 = vector.broadcast %159 : vector<16x1xf32> to vector<16x32xf32>
    %161 = arith.subf %155, %160 : vector<16x32xf32>
    %162 = arith.mulf %161, %161 : vector<16x32xf32>
    %cst_55 = arith.constant dense<0.000000e+00> : vector<16xf32>
    %163 = vector.multi_reduction <add>, %162, %cst_55 [1] : vector<16x32xf32> to vector<16xf32>
    %164 = vector.shape_cast %163 : vector<16xf32> to vector<16x1xf32>
    %cst_56 = arith.constant 3.200000e+01 : f32
    %165 = vector.broadcast %cst_56 : f32 to vector<16x1xf32>
    %166 = arith.divf %164, %165 : vector<16x1xf32>
    %167 = vector.broadcast %159 : vector<16x1xf32> to vector<16x32xf32>
    %168 = arith.subf %155, %167 : vector<16x32xf32>
    %cst_57 = arith.constant 9.99999974E-6 : f32
    %169 = vector.broadcast %cst_57 : f32 to vector<16x1xf32>
    %170 = arith.addf %166, %169 : vector<16x1xf32>
    %171 = math.rsqrt %170 : vector<16x1xf32>
    %172 = vector.broadcast %171 : vector<16x1xf32> to vector<16x32xf32>
    %173 = arith.mulf %168, %172 : vector<16x32xf32>
    %174 = vector.broadcast %6 : vector<1x32xf32> to vector<16x32xf32>
    %175 = arith.mulf %173, %174 : vector<16x32xf32>
    %176 = vector.broadcast %7 : vector<1x32xf32> to vector<16x32xf32>
    %177 = arith.addf %175, %176 : vector<16x32xf32>
    %178 = tpu.iota {dimensions = array<i32: 0>} : vector<2x16xi32>
    %179 = tpu.iota {dimensions = array<i32: 1>} : vector<2x16xi32>
    %c8_i32 = arith.constant 8 : i32
    %180 = vector.broadcast %c8_i32 : i32 to vector<2x16xi32>
    %181 = arith.muli %178, %180 : vector<2x16xi32>
    %182 = arith.cmpi sge, %179, %181 : vector<2x16xi32>
    %c1_i32 = arith.constant 1 : i32
    %183 = vector.broadcast %c1_i32 : i32 to vector<2x16xi32>
    %184 = arith.addi %178, %183 : vector<2x16xi32>
    %c8_i32_58 = arith.constant 8 : i32
    %185 = vector.broadcast %c8_i32_58 : i32 to vector<2x16xi32>
    %186 = arith.muli %184, %185 : vector<2x16xi32>
    %187 = arith.cmpi slt, %179, %186 : vector<2x16xi32>
    %188 = arith.andi %182, %187 : vector<2x16xi1>
    %cst_59 = arith.constant 1.250000e-01 : f32
    %cst_60 = arith.constant 0.000000e+00 : f32
    %189 = vector.broadcast %cst_59 : f32 to vector<2x16xf32>
    %190 = vector.broadcast %cst_60 : f32 to vector<2x16xf32>
    %191 = arith.select %188, %189, %190 : vector<2x16xi1>, vector<2x16xf32>
    %cst_61 = arith.constant dense<0.000000e+00> : vector<2x32xf32>
    %192 = tpu.matmul %191, %177, %cst_61 {dimension_numbers = #tpu.dot_dimension_numbers<[1], [0], [0], [1], [0, 0, 1, 1], [], []>} : vector<2x16xf32>, vector<16x32xf32>, vector<2x32xf32> -> vector<2x32xf32>
    %c0_62 = arith.constant 0 : index
    %c0_63 = arith.constant 0 : index
    %193 = vector.load %arg9[%c0_62, %c0_63] : memref<32x4xf32, #tpu.memory_space<vmem>>, vector<32x4xf32>
    %cst_64 = arith.constant dense<0.000000e+00> : vector<2x4xf32>
    %194 = tpu.matmul %192, %193, %cst_64 {dimension_numbers = #tpu.dot_dimension_numbers<[1], [0], [0], [1], [0, 0, 1, 1], [], []>} : vector<2x32xf32>, vector<32x4xf32>, vector<2x4xf32> -> vector<2x4xf32>
    %195 = vector.broadcast %8 : vector<1x4xf32> to vector<2x4xf32>
    %196 = arith.addf %194, %195 : vector<2x4xf32>
    %c0_65 = arith.constant 0 : index
    %c0_66 = arith.constant 0 : index
    %197 = vector.load %arg11[%c0_65, %c0_66] : memref<2x4xf32, #tpu.memory_space<vmem>>, vector<2x4xf32>
    tpu.vector_store %arg11[%c0_65, %c0_66], %196 {strides = array<i32>} : memref<2x4xf32, #tpu.memory_space<vmem>>, vector<2x4xf32>,
    return
  }
}

</mosaic_0001>

<llo_original>
// kernel: encoder_transformer_pallas.1
$region0: #{encoder_transformer_pallas.1}
  #allocation0 [shape = 'u32[]', space=smem, size = 0x4, offset = 0x4, fixed_abs, tag = 'smem constant byte address 0x4 - core index']
  #allocation1 [shape = 'u32[144,128]{1,0:T(1,128)}', space=vmem, size = 0x12000, scoped, tag = 'internal scratch']
  %s0 = inlined_call_operand.vmem [shape: s32[16,1], index: 0, kind: input, shape index: {}]
  %s1 = inlined_call_operand.vmem [shape: f32[64,32], index: 1, kind: input, shape index: {}]
  %s2 = inlined_call_operand.vmem [shape: f32[8,32], index: 2, kind: input, shape index: {}]
  %s3 = inlined_call_operand.vmem [shape: f32[32,32], index: 3, kind: input, shape index: {}]
  %s4 = inlined_call_operand.vmem [shape: f32[32,32], index: 4, kind: input, shape index: {}]
  %s5 = inlined_call_operand.vmem [shape: f32[32,32], index: 5, kind: input, shape index: {}]
  %s6 = inlined_call_operand.vmem [shape: f32[32,32], index: 6, kind: input, shape index: {}]
  %s7 = inlined_call_operand.vmem [shape: f32[32,128], index: 7, kind: input, shape index: {}]
  %s8 = inlined_call_operand.vmem [shape: f32[128,32], index: 8, kind: input, shape index: {}]
  %s9 = inlined_call_operand.vmem [shape: f32[32,4], index: 9, kind: input, shape index: {}]
  %s10 = inlined_call_operand.vmem [shape: f32[8,128], index: 10, kind: input, shape index: {}]
  %s11 = inlined_call_operand.hbm [shape: f32[2,4], index: 11, kind: output, shape index: {}]
  %s12 = sld [smem:[#allocation0]]
  $region54: #{encoder_transformer_pallas.1} parent=0
    _
  %s14 = ssub.s32 1, %s12
  %s15 = scalar_select 0, %s14, %s12
  $region1: #{encoder_transformer_pallas.1} parent=0
    #allocation2 [shape = 'u8[1024]{0}', space=vmem, size = 0x400, scoped, tag = 'output window, operand 0, single buffered']
    #allocation3 [shape = 's32[1]{0}', space=sflag, size = 0x4, scoped, tag = 'scoped memory for encoder_transformer_pallas.1']
    %16 = vsyncpa [#allocation3], 0
    // Predicated region
    $region2: #{encoder_transformer_pallas.1} parent=1 // pred_check
      _
    $region3: #{encoder_transformer_pallas.1} parent=1 // pred_check_branch
      %18 = sbr.rel (0) target = $region5
    $region4: #{encoder_transformer_pallas.1} parent=1 // pred_region
      _
    $region5: #{encoder_transformer_pallas.1} parent=1 // pred_fallthru
      _
    // Predicated region
    $region6: #{encoder_transformer_pallas.1} parent=1 // pred_check
      _
    $region7: #{encoder_transformer_pallas.1} parent=1 // pred_check_branch
      %20 = sbr.rel (0) target = $region9
    $region8: #{encoder_transformer_pallas.1} parent=1 // pred_region
      _
    $region9: #{encoder_transformer_pallas.1} parent=1 // pred_fallthru
      _
    // Predicated region
    $region10: #{encoder_transformer_pallas.1} parent=1 // pred_check
      _
    $region11: #{encoder_transformer_pallas.1} parent=1 // pred_check_branch
      %22 = sbr.rel (0) target = $region13
    $region12: #{encoder_transformer_pallas.1} parent=1 // pred_region
      _
    $region13: #{encoder_transformer_pallas.1} parent=1 // pred_fallthru
      _
    // Predicated region
    $region14: #{encoder_transformer_pallas.1} parent=1 // pred_check
      _
    $region15: #{encoder_transformer_pallas.1} parent=1 // pred_check_branch
      %24 = sbr.rel (0) target = $region17
    $region16: #{encoder_transformer_pallas.1} parent=1 // pred_region
      _
    $region17: #{encoder_transformer_pallas.1} parent=1 // pred_fallthru
      _
    // Predicated region
    $region18: #{encoder_transformer_pallas.1} parent=1 // pred_check
      _
    $region19: #{encoder_transformer_pallas.1} parent=1 // pred_check_branch
      %26 = sbr.rel (0) target = $region21
    $region20: #{encoder_transformer_pallas.1} parent=1 // pred_region
      _
    $region21: #{encoder_transformer_pallas.1} parent=1 // pred_fallthru
      _
    // Predicated region
    $region22: #{encoder_transformer_pallas.1} parent=1 // pred_check
      _
    $region23: #{encoder_transformer_pallas.1} parent=1 // pred_check_branch
      %28 = sbr.rel (0) target = $region25
    $region24: #{encoder_transformer_pallas.1} parent=1 // pred_region
      _
    $region25: #{encoder_transformer_pallas.1} parent=1 // pred_fallthru
      _
    // Predicated region
    $region26: #{encoder_transformer_pallas.1} parent=1 // pred_check
      _
    $region27: #{encoder_transformer_pallas.1} parent=1 // pred_check_branch
      %30 = sbr.rel (0) target = $region29
    $region28: #{encoder_transformer_pallas.1} parent=1 // pred_region
      _
    $region29: #{encoder_transformer_pallas.1} parent=1 // pred_fallthru
      _
    // Predicated region
    $region30: #{encoder_transformer_pallas.1} parent=1 // pred_check
      _
    $region31: #{encoder_transformer_pallas.1} parent=1 // pred_check_branch
      %32 = sbr.rel (0) target = $region33
    $region32: #{encoder_transformer_pallas.1} parent=1 // pred_region
      _
    $region33: #{encoder_transformer_pallas.1} parent=1 // pred_fallthru
      _
    // Predicated region
    $region34: #{encoder_transformer_pallas.1} parent=1 // pred_check
      _
    $region35: #{encoder_transformer_pallas.1} parent=1 // pred_check_branch
      %34 = sbr.rel (0) target = $region37
    $region36: #{encoder_transformer_pallas.1} parent=1 // pred_region
      _
    $region37: #{encoder_transformer_pallas.1} parent=1 // pred_fallthru
      _
    // Predicated region
    $region38: #{encoder_transformer_pallas.1} parent=1 // pred_check
      _
    $region39: #{encoder_transformer_pallas.1} parent=1 // pred_check_branch
      %36 = sbr.rel (0) target = $region41
    $region40: #{encoder_transformer_pallas.1} parent=1 // pred_region
      _
    $region41: #{encoder_transformer_pallas.1} parent=1 // pred_fallthru
      _
    // Predicated region
    $region42: #{encoder_transformer_pallas.1} parent=1 // pred_check
      _
    $region43: #{encoder_transformer_pallas.1} parent=1 // pred_check_branch
      %38 = sbr.rel (0) target = $region45
    $region44: #{encoder_transformer_pallas.1} parent=1 // pred_region
      _
    $region45: #{encoder_transformer_pallas.1} parent=1 // pred_fallthru
      _
    %v39 = vld [vmem:[%s10] sm:$0xff]
    %v40 = vld [vmem:[%s0] sm:$0xff]
    %v41 = vld [vmem:[%s0 + $0x8] sm:$0xff]
    %v42 = vlaneseq
    %v43 = vand.u32 %v42, 127
    %44 = vset.pattern.permute.xlu0 0
    %45 = vperm.xlu0 %44, %v40
    %v46 = vpop.permute.xlu0 %45
    %47 = vset.pattern.permute.xlu0 0
    %48 = vperm.xlu0 %47, %v41
    %v49 = vpop.permute.xlu0 %48
    %vm50 = vcmp.eq.s32.totalorder %v43, %v46
    %vm51 = vcmp.eq.s32.totalorder %v43, %v49
    %v52 = vsel %vm50, 1, 0
    %v53 = vsel %vm51, 1, 0
    %v54 = vcvt.s32.f32 %v52
    %v55 = vcvt.s32.f32 %v53
    %v56 = vld [vmem:[%s1] sm:$0xff]
    %v57 = vld [vmem:[%s1 + $0x8] sm:$0xff]
    %v58 = vld [vmem:[%s1 + $0x10] sm:$0xff]
    %v59 = vld [vmem:[%s1 + $0x18] sm:$0xff]
    %v60 = vld [vmem:[%s1 + $0x20] sm:$0xff]
    %v61 = vld [vmem:[%s1 + $0x28] sm:$0xff]
    %v62 = vld [vmem:[%s1 + $0x30] sm:$0xff]
    %v63 = vld [vmem:[%s1 + $0x38] sm:$0xff]
    %vm64 = vcmask 523264
    %v66 = vsel %vm64, %v54, 0
    %v69 = vsel %vm64, %v55, 0
    %71 = vmatprep.subr.mxu0 0.0
    %72 = vmatpush1.msra.mxu0 %v56
    %73 = vmatprep.subr.mxu0 0.0
    %74 = vmatpush1.msra.mxu0 %v57
    %75 = vmatprep.subr.mxu0 0.0
    %76 = vmatpush1.msra.mxu0 %v58
    %77 = vmatprep.subr.mxu0 0.0
    %78 = vmatpush1.msra.mxu0 %v59
    %79 = vmatprep.subr.mxu0 0.0
    %80 = vmatpush1.msra.mxu0 %v60
    %81 = vmatprep.subr.mxu0 0.0
    %82 = vmatpush1.msra.mxu0 %v61
    %83 = vmatprep.subr.mxu0 0.0
    %84 = vmatpush1.msra.mxu0 %v62
    %85 = vmatprep.subr.mxu0 0.0
    %86 = vmatpush1.msra.mxu0 %v63
    %87 = vmatprep.subr.mxu0 0.0
    %88 = vmatpush1.msra.mxu0 0.0
    %89 = vmatprep.subr.mxu0 0.0
    %90 = vmatpush1.msra.mxu0 0.0
    %91 = vmatprep.subr.mxu0 0.0
    %92 = vmatpush1.msra.mxu0 0.0
    %93 = vmatprep.subr.mxu0 0.0
    %94 = vmatpush1.msra.mxu0 0.0
    %95 = vmatprep.subr.mxu0 0.0
    %96 = vmatpush1.msra.mxu0 0.0
    %97 = vmatprep.subr.mxu0 0.0
    %98 = vmatpush1.msra.mxu0 0.0
    %99 = vmatprep.subr.mxu0 0.0
    %100 = vmatpush1.msra.mxu0 0.0
    %101 = vmatprep.subr.mxu0 0.0
    %102 = vmatpush1.msra.mxu0 0.0
    %103 = vmatprep.subr.mxu0 0.0
    %104 = vmatpush1.msra.mxu0 0.0
    %105 = vmatprep.subr.mxu0 0.0
    %106 = vmatpush1.msra.mxu0 0.0
    %107 = vmatprep.subr.mxu0 0.0
    %108 = vmatpush1.msra.mxu0 0.0
    %109 = vmatprep.subr.mxu0 0.0
    %110 = vmatpush1.msra.mxu0 0.0
    %111 = vmatprep.subr.mxu0 0.0
    %112 = vmatpush1.msra.mxu0 0.0
    %113 = vmatprep.subr.mxu0 0.0
    %114 = vmatpush1.msra.mxu0 0.0
    %115 = vmatprep.subr.mxu0 0.0
    %116 = vmatpush1.msra.mxu0 0.0
    %117 = vmatprep.subr.mxu0 0.0
    %118 = vmatpush1.msra.mxu0 0.0
    %119 = vmatprep.subr.mxu0 0.0
    %120 = vmatpush1.msra.mxu0 0.0
    %121 = vmatprep.subr.mxu0 0.0
    %122 = vmatpush1.msra.mxu0 0.0
    %123 = vmatprep.subr.mxu0 0.0
    %124 = vmatpush1.msra.mxu0 0.0
    %125 = vmatprep.subr.mxu0 0.0
    %126 = vmatpush1.msra.mxu0 0.0
    %127 = vmatprep.subr.mxu0 0.0
    %128 = vmatpush1.msra.mxu0 0.0
    %129 = vmatprep.subr.mxu0 0.0
    %130 = vmatpush1.msra.mxu0 0.0
    %131 = vmatprep.subr.mxu0 0.0
    %132 = vmatpush1.msra.mxu0 0.0
    %133 = vmatprep.subr.mxu0 0.0
    %134 = vmatpush1.msra.mxu0 0.0
    %135 = vmatprep.mubr.f32.mxu0 0.0
    %136 = vmatmul.mubr.f32.gmra.mrb[0].mxu0 %v66
    %v137 = vpop.f32.mrb[0].mxu0
    %v138 = vadd.f32 0.0, %v137
    %v139 = vpop.f32.mrb[0].mxu0
    %140 = vmatprep.mubr.f32.mxu0 0.0
    %141 = vmatmul.mubr.f32.gmra.mrb[0].mxu0 %v69
    %v142 = vpop.f32.mrb[0].mxu0
    %v143 = vadd.f32 0.0, %v142
    %v144 = vpop.f32.mrb[0].mxu0
    %145 = vdwg.mxu0
    %v146 = vld [vmem:[%s2] sm:$0xff]
    %v147 = vadd.f32 %v138, %v146
    %v148 = vadd.f32 %v143, %v146
    %v149 = vld [vmem:[%s3] sm:$0xff]
    %v150 = vld [vmem:[%s3 + $0x8] sm:$0xff]
    %v151 = vld [vmem:[%s3 + $0x10] sm:$0xff]
    %v152 = vld [vmem:[%s3 + $0x18] sm:$0xff]
    %vm153 = vcmask 261120
    %v155 = vsel %vm153, %v147, 0
    %v158 = vsel %vm153, %v148, 0
    %160 = vmatprep.subr.mxu0 0.0
    %161 = vmatpush1.msra.mxu0 %v149
    %162 = vmatprep.subr.mxu0 0.0
    %163 = vmatpush1.msra.mxu0 %v150
    %164 = vmatprep.subr.mxu0 0.0
    %165 = vmatpush1.msra.mxu0 %v151
    %166 = vmatprep.subr.mxu0 0.0
    %167 = vmatpush1.msra.mxu0 %v152
    %168 = vmatprep.subr.mxu0 0.0
    %169 = vmatpush1.msra.mxu0 0.0
    %170 = vmatprep.subr.mxu0 0.0
    %171 = vmatpush1.msra.mxu0 0.0
    %172 = vmatprep.subr.mxu0 0.0
    %173 = vmatpush1.msra.mxu0 0.0
    %174 = vmatprep.subr.mxu0 0.0
    %175 = vmatpush1.msra.mxu0 0.0
    %176 = vmatprep.subr.mxu0 0.0
    %177 = vmatpush1.msra.mxu0 0.0
    %178 = vmatprep.subr.mxu0 0.0
    %179 = vmatpush1.msra.mxu0 0.0
    %180 = vmatprep.subr.mxu0 0.0
    %181 = vmatpush1.msra.mxu0 0.0
    %182 = vmatprep.subr.mxu0 0.0
    %183 = vmatpush1.msra.mxu0 0.0
    %184 = vmatprep.subr.mxu0 0.0
    %185 = vmatpush1.msra.mxu0 0.0
    %186 = vmatprep.subr.mxu0 0.0
    %187 = vmatpush1.msra.mxu0 0.0
    %188 = vmatprep.subr.mxu0 0.0
    %189 = vmatpush1.msra.mxu0 0.0
    %190 = vmatprep.subr.mxu0 0.0
    %191 = vmatpush1.msra.mxu0 0.0
    %192 = vmatprep.subr.mxu0 0.0
    %193 = vmatpush1.msra.mxu0 0.0
    %194 = vmatprep.subr.mxu0 0.0
    %195 = vmatpush1.msra.mxu0 0.0
    %196 = vmatprep.subr.mxu0 0.0
    %197 = vmatpush1.msra.mxu0 0.0
    %198 = vmatprep.subr.mxu0 0.0
    %199 = vmatpush1.msra.mxu0 0.0
    %200 = vmatprep.subr.mxu0 0.0
    %201 = vmatpush1.msra.mxu0 0.0
    %202 = vmatprep.subr.mxu0 0.0
    %203 = vmatpush1.msra.mxu0 0.0
    %204 = vmatprep.subr.mxu0 0.0
    %205 = vmatpush1.msra.mxu0 0.0
    %206 = vmatprep.subr.mxu0 0.0
    %207 = vmatpush1.msra.mxu0 0.0
    %208 = vmatprep.subr.mxu0 0.0
    %209 = vmatpush1.msra.mxu0 0.0
    %210 = vmatprep.subr.mxu0 0.0
    %211 = vmatpush1.msra.mxu0 0.0
    %212 = vmatprep.subr.mxu0 0.0
    %213 = vmatpush1.msra.mxu0 0.0
    %214 = vmatprep.subr.mxu0 0.0
    %215 = vmatpush1.msra.mxu0 0.0
    %216 = vmatprep.subr.mxu0 0.0
    %217 = vmatpush1.msra.mxu0 0.0
    %218 = vmatprep.subr.mxu0 0.0
    %219 = vmatpush1.msra.mxu0 0.0
    %220 = vmatprep.subr.mxu0 0.0
    %221 = vmatpush1.msra.mxu0 0.0
    %222 = vmatprep.subr.mxu0 0.0
    %223 = vmatpush1.msra.mxu0 0.0
    %224 = vmatprep.mubr.f32.mxu0 0.0
    %225 = vmatmul.mubr.f32.gmra.mrb[0].mxu0 %v155
    %v226 = vpop.f32.mrb[0].mxu0
    %v227 = vadd.f32 0.0, %v226
    %v228 = vpop.f32.mrb[0].mxu0
    %229 = vmatprep.mubr.f32.mxu0 0.0
    %230 = vmatmul.mubr.f32.gmra.mrb[0].mxu0 %v158
    %v231 = vpop.f32.mrb[0].mxu0
    %v232 = vadd.f32 0.0, %v231
    %v233 = vpop.f32.mrb[0].mxu0
    %234 = vdwg.mxu0
    %v235 = vld [vmem:[%s4] sm:$0xff]
    %v236 = vld [vmem:[%s4 + $0x8] sm:$0xff]
    %v237 = vld [vmem:[%s4 + $0x10] sm:$0xff]
    %v238 = vld [vmem:[%s4 + $0x18] sm:$0xff]
    %239 = vmatprep.subr.mxu0 0.0
    %240 = vmatpush1.msra.mxu0 %v235
    %241 = vmatprep.subr.mxu0 0.0
    %242 = vmatpush1.msra.mxu0 %v236
    %243 = vmatprep.subr.mxu0 0.0
    %244 = vmatpush1.msra.mxu0 %v237
    %245 = vmatprep.subr.mxu0 0.0
    %246 = vmatpush1.msra.mxu0 %v238
    %247 = vmatprep.subr.mxu0 0.0
    %248 = vmatpush1.msra.mxu0 0.0
    %249 = vmatprep.subr.mxu0 0.0
    %250 = vmatpush1.msra.mxu0 0.0
    %251 = vmatprep.subr.mxu0 0.0
    %252 = vmatpush1.msra.mxu0 0.0
    %253 = vmatprep.subr.mxu0 0.0
    %254 = vmatpush1.msra.mxu0 0.0
    %255 = vmatprep.subr.mxu0 0.0
    %256 = vmatpush1.msra.mxu0 0.0
    %257 = vmatprep.subr.mxu0 0.0
    %258 = vmatpush1.msra.mxu0 0.0
    %259 = vmatprep.subr.mxu0 0.0
    %260 = vmatpush1.msra.mxu0 0.0
    %261 = vmatprep.subr.mxu0 0.0
    %262 = vmatpush1.msra.mxu0 0.0
    %263 = vmatprep.subr.mxu0 0.0
    %264 = vmatpush1.msra.mxu0 0.0
    %265 = vmatprep.subr.mxu0 0.0
    %266 = vmatpush1.msra.mxu0 0.0
    %267 = vmatprep.subr.mxu0 0.0
    %268 = vmatpush1.msra.mxu0 0.0
    %269 = vmatprep.subr.mxu0 0.0
    %270 = vmatpush1.msra.mxu0 0.0
    %271 = vmatprep.subr.mxu0 0.0
    %272 = vmatpush1.msra.mxu0 0.0
    %273 = vmatprep.subr.mxu0 0.0
    %274 = vmatpush1.msra.mxu0 0.0
    %275 = vmatprep.subr.mxu0 0.0
    %276 = vmatpush1.msra.mxu0 0.0
    %277 = vmatprep.subr.mxu0 0.0
    %278 = vmatpush1.msra.mxu0 0.0
    %279 = vmatprep.subr.mxu0 0.0
    %280 = vmatpush1.msra.mxu0 0.0
    %281 = vmatprep.subr.mxu0 0.0
    %282 = vmatpush1.msra.mxu0 0.0
    %283 = vmatprep.subr.mxu0 0.0
    %284 = vmatpush1.msra.mxu0 0.0
    %285 = vmatprep.subr.mxu0 0.0
    %286 = vmatpush1.msra.mxu0 0.0
    %287 = vmatprep.subr.mxu0 0.0
    %288 = vmatpush1.msra.mxu0 0.0
    %289 = vmatprep.subr.mxu0 0.0
    %290 = vmatpush1.msra.mxu0 0.0
    %291 = vmatprep.subr.mxu0 0.0
    %292 = vmatpush1.msra.mxu0 0.0
    %293 = vmatprep.subr.mxu0 0.0
    %294 = vmatpush1.msra.mxu0 0.0
    %295 = vmatprep.subr.mxu0 0.0
    %296 = vmatpush1.msra.mxu0 0.0
    %297 = vmatprep.subr.mxu0 0.0
    %298 = vmatpush1.msra.mxu0 0.0
    %299 = vmatprep.subr.mxu0 0.0
    %300 = vmatpush1.msra.mxu0 0.0
    %301 = vmatprep.subr.mxu0 0.0
    %302 = vmatpush1.msra.mxu0 0.0
    %303 = vmatprep.mubr.f32.mxu0 0.0
    %304 = vmatmul.mubr.f32.gmra.mrb[0].mxu0 %v155
    %v305 = vpop.f32.mrb[0].mxu0
    %v306 = vadd.f32 0.0, %v305
    %v307 = vpop.f32.mrb[0].mxu0
    %308 = vmatprep.mubr.f32.mxu0 0.0
    %309 = vmatmul.mubr.f32.gmra.mrb[0].mxu0 %v158
    %v310 = vpop.f32.mrb[0].mxu0
    %v311 = vadd.f32 0.0, %v310
    %v312 = vpop.f32.mrb[0].mxu0
    %313 = vdwg.mxu0
    %v314 = vld [vmem:[%s5] sm:$0xff]
    %v315 = vld [vmem:[%s5 + $0x8] sm:$0xff]
    %v316 = vld [vmem:[%s5 + $0x10] sm:$0xff]
    %v317 = vld [vmem:[%s5 + $0x18] sm:$0xff]
    %318 = vmatprep.subr.mxu0 0.0
    %319 = vmatpush1.msra.mxu0 %v314
    %320 = vmatprep.subr.mxu0 0.0
    %321 = vmatpush1.msra.mxu0 %v315
    %322 = vmatprep.subr.mxu0 0.0
    %323 = vmatpush1.msra.mxu0 %v316
    %324 = vmatprep.subr.mxu0 0.0
    %325 = vmatpush1.msra.mxu0 %v317
    %326 = vmatprep.subr.mxu0 0.0
    %327 = vmatpush1.msra.mxu0 0.0
    %328 = vmatprep.subr.mxu0 0.0
    %329 = vmatpush1.msra.mxu0 0.0
    %330 = vmatprep.subr.mxu0 0.0
    %331 = vmatpush1.msra.mxu0 0.0
    %332 = vmatprep.subr.mxu0 0.0
    %333 = vmatpush1.msra.mxu0 0.0
    %334 = vmatprep.subr.mxu0 0.0
    %335 = vmatpush1.msra.mxu0 0.0
    %336 = vmatprep.subr.mxu0 0.0
    %337 = vmatpush1.msra.mxu0 0.0
    %338 = vmatprep.subr.mxu0 0.0
    %339 = vmatpush1.msra.mxu0 0.0
    %340 = vmatprep.subr.mxu0 0.0
    %341 = vmatpush1.msra.mxu0 0.0
    %342 = vmatprep.subr.mxu0 0.0
    %343 = vmatpush1.msra.mxu0 0.0
    %344 = vmatprep.subr.mxu0 0.0
    %345 = vmatpush1.msra.mxu0 0.0
    %346 = vmatprep.subr.mxu0 0.0
    %347 = vmatpush1.msra.mxu0 0.0
    %348 = vmatprep.subr.mxu0 0.0
    %349 = vmatpush1.msra.mxu0 0.0
    %350 = vmatprep.subr.mxu0 0.0
    %351 = vmatpush1.msra.mxu0 0.0
    %352 = vmatprep.subr.mxu0 0.0
    %353 = vmatpush1.msra.mxu0 0.0
    %354 = vmatprep.subr.mxu0 0.0
    %355 = vmatpush1.msra.mxu0 0.0
    %356 = vmatprep.subr.mxu0 0.0
    %357 = vmatpush1.msra.mxu0 0.0
    %358 = vmatprep.subr.mxu0 0.0
    %359 = vmatpush1.msra.mxu0 0.0
    %360 = vmatprep.subr.mxu0 0.0
    %361 = vmatpush1.msra.mxu0 0.0
    %362 = vmatprep.subr.mxu0 0.0
    %363 = vmatpush1.msra.mxu0 0.0
    %364 = vmatprep.subr.mxu0 0.0
    %365 = vmatpush1.msra.mxu0 0.0
    %366 = vmatprep.subr.mxu0 0.0
    %367 = vmatpush1.msra.mxu0 0.0
    %368 = vmatprep.subr.mxu0 0.0
    %369 = vmatpush1.msra.mxu0 0.0
    %370 = vmatprep.subr.mxu0 0.0
    %371 = vmatpush1.msra.mxu0 0.0
    %372 = vmatprep.subr.mxu0 0.0
    %373 = vmatpush1.msra.mxu0 0.0
    %374 = vmatprep.subr.mxu0 0.0
    %375 = vmatpush1.msra.mxu0 0.0
    %376 = vmatprep.subr.mxu0 0.0
    %377 = vmatpush1.msra.mxu0 0.0
    %378 = vmatprep.subr.mxu0 0.0
    %379 = vmatpush1.msra.mxu0 0.0
    %380 = vmatprep.subr.mxu0 0.0
    %381 = vmatpush1.msra.mxu0 0.0
    %382 = vmatprep.mubr.f32.mxu0 0.0
    %383 = vmatmul.mubr.f32.gmra.mrb[0].mxu0 %v155
    %v384 = vpop.f32.mrb[0].mxu0
    %v385 = vadd.f32 0.0, %v384
    %v386 = vpop.f32.mrb[0].mxu0
    %387 = vmatprep.mubr.f32.mxu0 0.0
    %388 = vmatmul.mubr.f32.gmra.mrb[0].mxu0 %v158
    %v389 = vpop.f32.mrb[0].mxu0
    %v390 = vadd.f32 0.0, %v389
    %v391 = vpop.f32.mrb[0].mxu0
    %392 = vdwg.mxu0
    %v393 = vld [vmem:[%s6] sm:$0xff]
    %v394 = vld [vmem:[%s6 + $0x8] sm:$0xff]
    %v395 = vld [vmem:[%s6 + $0x10] sm:$0xff]
    %v396 = vld [vmem:[%s6 + $0x18] sm:$0xff]
    %vm397 = vcmask 64512
    %v399 = vsel %vm397, %v227, 0
    %v402 = vsel %vm397, %v306, 0
    %404 = vmatprep.subr.mxu0 0.0
    %405 = vmatpush1.xpose.msra.mxu0 %v402
    %406 = vmatprep.subr.mxu0 0.0
    %407 = vmatpush1.xpose.msra.mxu0 0.0
    %408 = vmatprep.subr.mxu0 0.0
    %409 = vmatpush1.xpose.msra.mxu0 0.0
    %410 = vmatprep.subr.mxu0 0.0
    %411 = vmatpush1.xpose.msra.mxu0 0.0
    %412 = vmatprep.subr.mxu0 0.0
    %413 = vmatpush1.xpose.msra.mxu0 0.0
    %414 = vmatprep.subr.mxu0 0.0
    %415 = vmatpush1.xpose.msra.mxu0 0.0
    %416 = vmatprep.subr.mxu0 0.0
    %417 = vmatpush1.xpose.msra.mxu0 0.0
    %418 = vmatprep.subr.mxu0 0.0
    %419 = vmatpush1.xpose.msra.mxu0 0.0
    %420 = vmatprep.subr.mxu0 0.0
    %421 = vmatpush1.xpose.msra.mxu0 0.0
    %422 = vmatprep.subr.mxu0 0.0
    %423 = vmatpush1.xpose.msra.mxu0 0.0
    %424 = vmatprep.subr.mxu0 0.0
    %425 = vmatpush1.xpose.msra.mxu0 0.0
    %426 = vmatprep.subr.mxu0 0.0
    %427 = vmatpush1.xpose.msra.mxu0 0.0
    %428 = vmatprep.subr.mxu0 0.0
    %429 = vmatpush1.xpose.msra.mxu0 0.0
    %430 = vmatprep.subr.mxu0 0.0
    %431 = vmatpush1.xpose.msra.mxu0 0.0
    %432 = vmatprep.subr.mxu0 0.0
    %433 = vmatpush1.xpose.msra.mxu0 0.0
    %434 = vmatprep.subr.mxu0 0.0
    %435 = vmatpush1.xpose.msra.mxu0 0.0
    %436 = vmatprep.subr.mxu0 0.0
    %437 = vmatpush1.xpose.msra.mxu0 0.0
    %438 = vmatprep.subr.mxu0 0.0
    %439 = vmatpush1.xpose.msra.mxu0 0.0
    %440 = vmatprep.subr.mxu0 0.0
    %441 = vmatpush1.xpose.msra.mxu0 0.0
    %442 = vmatprep.subr.mxu0 0.0
    %443 = vmatpush1.xpose.msra.mxu0 0.0
    %444 = vmatprep.subr.mxu0 0.0
    %445 = vmatpush1.xpose.msra.mxu0 0.0
    %446 = vmatprep.subr.mxu0 0.0
    %447 = vmatpush1.xpose.msra.mxu0 0.0
    %448 = vmatprep.subr.mxu0 0.0
    %449 = vmatpush1.xpose.msra.mxu0 0.0
    %450 = vmatprep.subr.mxu0 0.0
    %451 = vmatpush1.xpose.msra.mxu0 0.0
    %452 = vmatprep.subr.mxu0 0.0
    %453 = vmatpush1.xpose.msra.mxu0 0.0
    %454 = vmatprep.subr.mxu0 0.0
    %455 = vmatpush1.xpose.msra.mxu0 0.0
    %456 = vmatprep.subr.mxu0 0.0
    %457 = vmatpush1.xpose.msra.mxu0 0.0
    %458 = vmatprep.subr.mxu0 0.0
    %459 = vmatpush1.xpose.msra.mxu0 0.0
    %460 = vmatprep.subr.mxu0 0.0
    %461 = vmatpush1.xpose.msra.mxu0 0.0
    %462 = vmatprep.subr.mxu0 0.0
    %463 = vmatpush1.xpose.msra.mxu0 0.0
    %464 = vmatprep.subr.mxu0 0.0
    %465 = vmatpush1.xpose.msra.mxu0 0.0
    %466 = vmatprep.subr.mxu0 0.0
    %467 = vmatpush1.xpose.msra.mxu0 0.0
    %468 = vmatprep.mubr.f32.mxu0 0.0
    %469 = vmatmul.mubr.f32.gmra.mrb[0].mxu0 %v399
    %v470 = vpop.f32.mrb[0].mxu0
    %v471 = vadd.f32 0.0, %v470
    %v472 = vpop.f32.mrb[0].mxu0
    %473 = vdwg.mxu0
    %v475 = vsel %vm397, %v232, 0
    %v478 = vsel %vm397, %v311, 0
    %480 = vmatprep.subr.mxu0 0.0
    %481 = vmatpush1.xpose.msra.mxu0 %v478
    %482 = vmatprep.subr.mxu0 0.0
    %483 = vmatpush1.xpose.msra.mxu0 0.0
    %484 = vmatprep.subr.mxu0 0.0
    %485 = vmatpush1.xpose.msra.mxu0 0.0
    %486 = vmatprep.subr.mxu0 0.0
    %487 = vmatpush1.xpose.msra.mxu0 0.0
    %488 = vmatprep.subr.mxu0 0.0
    %489 = vmatpush1.xpose.msra.mxu0 0.0
    %490 = vmatprep.subr.mxu0 0.0
    %491 = vmatpush1.xpose.msra.mxu0 0.0
    %492 = vmatprep.subr.mxu0 0.0
    %493 = vmatpush1.xpose.msra.mxu0 0.0
    %494 = vmatprep.subr.mxu0 0.0
    %495 = vmatpush1.xpose.msra.mxu0 0.0
    %496 = vmatprep.subr.mxu0 0.0
    %497 = vmatpush1.xpose.msra.mxu0 0.0
    %498 = vmatprep.subr.mxu0 0.0
    %499 = vmatpush1.xpose.msra.mxu0 0.0
    %500 = vmatprep.subr.mxu0 0.0
    %501 = vmatpush1.xpose.msra.mxu0 0.0
    %502 = vmatprep.subr.mxu0 0.0
    %503 = vmatpush1.xpose.msra.mxu0 0.0
    %504 = vmatprep.subr.mxu0 0.0
    %505 = vmatpush1.xpose.msra.mxu0 0.0
    %506 = vmatprep.subr.mxu0 0.0
    %507 = vmatpush1.xpose.msra.mxu0 0.0
    %508 = vmatprep.subr.mxu0 0.0
    %509 = vmatpush1.xpose.msra.mxu0 0.0
    %510 = vmatprep.subr.mxu0 0.0
    %511 = vmatpush1.xpose.msra.mxu0 0.0
    %512 = vmatprep.subr.mxu0 0.0
    %513 = vmatpush1.xpose.msra.mxu0 0.0
    %514 = vmatprep.subr.mxu0 0.0
    %515 = vmatpush1.xpose.msra.mxu0 0.0
    %516 = vmatprep.subr.mxu0 0.0
    %517 = vmatpush1.xpose.msra.mxu0 0.0
    %518 = vmatprep.subr.mxu0 0.0
    %519 = vmatpush1.xpose.msra.mxu0 0.0
    %520 = vmatprep.subr.mxu0 0.0
    %521 = vmatpush1.xpose.msra.mxu0 0.0
    %522 = vmatprep.subr.mxu0 0.0
    %523 = vmatpush1.xpose.msra.mxu0 0.0
    %524 = vmatprep.subr.mxu0 0.0
    %525 = vmatpush1.xpose.msra.mxu0 0.0
    %526 = vmatprep.subr.mxu0 0.0
    %527 = vmatpush1.xpose.msra.mxu0 0.0
    %528 = vmatprep.subr.mxu0 0.0
    %529 = vmatpush1.xpose.msra.mxu0 0.0
    %530 = vmatprep.subr.mxu0 0.0
    %531 = vmatpush1.xpose.msra.mxu0 0.0
    %532 = vmatprep.subr.mxu0 0.0
    %533 = vmatpush1.xpose.msra.mxu0 0.0
    %534 = vmatprep.subr.mxu0 0.0
    %535 = vmatpush1.xpose.msra.mxu0 0.0
    %536 = vmatprep.subr.mxu0 0.0
    %537 = vmatpush1.xpose.msra.mxu0 0.0
    %538 = vmatprep.subr.mxu0 0.0
    %539 = vmatpush1.xpose.msra.mxu0 0.0
    %540 = vmatprep.subr.mxu0 0.0
    %541 = vmatpush1.xpose.msra.mxu0 0.0
    %542 = vmatprep.subr.mxu0 0.0
    %543 = vmatpush1.xpose.msra.mxu0 0.0
    %544 = vmatprep.mubr.f32.mxu0 0.0
    %545 = vmatmul.mubr.f32.gmra.mrb[0].mxu0 %v475
    %v546 = vpop.f32.mrb[0].mxu0
    %v547 = vadd.f32 0.0, %v546
    %v548 = vpop.f32.mrb[0].mxu0
    %549 = vdwg.mxu0
    %v550 = vmul.f32 %v471, 0.17677669
    %v551 = vmul.f32 %v547, 0.17677669
    %v552 = vsel %vm397, %v550, -inf
    %553 = vmax.xlane.f32.xlu0 %v552
    %v554 = vpop.xlane.xlu0 %553
    %v555 = vsel %vm397, %v551, -inf
    %556 = vmax.xlane.f32.xlu0 %v555
    %v557 = vpop.xlane.xlu0 %556
    %v558 = vsub.f32 %v550, %v554
    %v559 = vsub.f32 %v551, %v557
    %v560 = vmul.f32 %v558, 1.442695
    %v561 = vpow.pop %v560
    %v562 = vmul.f32 %v559, 1.442695
    %v563 = vpow.pop %v562
    %v564 = vsel %vm397, %v561, 0.0
    %565 = vadd.xlane.f32.xlu0 %v564
    %v566 = vpop.xlane.xlu0 %565
    %v567 = vsel %vm397, %v563, 0.0
    %568 = vadd.xlane.f32.xlu0 %v567
    %v569 = vpop.xlane.xlu0 %568
    %v570 = vrcp.pop %v566
    %v571 = vrcp.pop %v569
    %v572 = vmul.f32 %v561, %v570
    %v573 = vmul.f32 %v563, %v571
    %v575 = vsel %vm397, %v572, 0
    %577 = vmatprep.subr.mxu0 0.0
    %578 = vmatpush1.msra.mxu0 %v385
    %579 = vmatprep.subr.mxu0 0.0
    %580 = vmatpush1.msra.mxu0 0.0
    %581 = vmatprep.subr.mxu0 0.0
    %582 = vmatpush1.msra.mxu0 0.0
    %583 = vmatprep.subr.mxu0 0.0
    %584 = vmatpush1.msra.mxu0 0.0
    %585 = vmatprep.subr.mxu0 0.0
    %586 = vmatpush1.msra.mxu0 0.0
    %587 = vmatprep.subr.mxu0 0.0
    %588 = vmatpush1.msra.mxu0 0.0
    %589 = vmatprep.subr.mxu0 0.0
    %590 = vmatpush1.msra.mxu0 0.0
    %591 = vmatprep.subr.mxu0 0.0
    %592 = vmatpush1.msra.mxu0 0.0
    %593 = vmatprep.subr.mxu0 0.0
    %594 = vmatpush1.msra.mxu0 0.0
    %595 = vmatprep.subr.mxu0 0.0
    %596 = vmatpush1.msra.mxu0 0.0
    %597 = vmatprep.subr.mxu0 0.0
    %598 = vmatpush1.msra.mxu0 0.0
    %599 = vmatprep.subr.mxu0 0.0
    %600 = vmatpush1.msra.mxu0 0.0
    %601 = vmatprep.subr.mxu0 0.0
    %602 = vmatpush1.msra.mxu0 0.0
    %603 = vmatprep.subr.mxu0 0.0
    %604 = vmatpush1.msra.mxu0 0.0
    %605 = vmatprep.subr.mxu0 0.0
    %606 = vmatpush1.msra.mxu0 0.0
    %607 = vmatprep.subr.mxu0 0.0
    %608 = vmatpush1.msra.mxu0 0.0
    %609 = vmatprep.subr.mxu0 0.0
    %610 = vmatpush1.msra.mxu0 0.0
    %611 = vmatprep.subr.mxu0 0.0
    %612 = vmatpush1.msra.mxu0 0.0
    %613 = vmatprep.subr.mxu0 0.0
    %614 = vmatpush1.msra.mxu0 0.0
    %615 = vmatprep.subr.mxu0 0.0
    %616 = vmatpush1.msra.mxu0 0.0
    %617 = vmatprep.subr.mxu0 0.0
    %618 = vmatpush1.msra.mxu0 0.0
    %619 = vmatprep.subr.mxu0 0.0
    %620 = vmatpush1.msra.mxu0 0.0
    %621 = vmatprep.subr.mxu0 0.0
    %622 = vmatpush1.msra.mxu0 0.0
    %623 = vmatprep.subr.mxu0 0.0
    %624 = vmatpush1.msra.mxu0 0.0
    %625 = vmatprep.subr.mxu0 0.0
    %626 = vmatpush1.msra.mxu0 0.0
    %627 = vmatprep.subr.mxu0 0.0
    %628 = vmatpush1.msra.mxu0 0.0
    %629 = vmatprep.subr.mxu0 0.0
    %630 = vmatpush1.msra.mxu0 0.0
    %631 = vmatprep.subr.mxu0 0.0
    %632 = vmatpush1.msra.mxu0 0.0
    %633 = vmatprep.subr.mxu0 0.0
    %634 = vmatpush1.msra.mxu0 0.0
    %635 = vmatprep.subr.mxu0 0.0
    %636 = vmatpush1.msra.mxu0 0.0
    %637 = vmatprep.subr.mxu0 0.0
    %638 = vmatpush1.msra.mxu0 0.0
    %639 = vmatprep.subr.mxu0 0.0
    %640 = vmatpush1.msra.mxu0 0.0
    %641 = vmatprep.mubr.f32.mxu0 0.0
    %642 = vmatmul.mubr.f32.gmra.mrb[0].mxu0 %v575
    %v643 = vpop.f32.mrb[0].mxu0
    %v644 = vadd.f32 0.0, %v643
    %v645 = vpop.f32.mrb[0].mxu0
    %646 = vdwg.mxu0
    %v648 = vsel %vm397, %v573, 0
    %650 = vmatprep.subr.mxu0 0.0
    %651 = vmatpush1.msra.mxu0 %v390
    %652 = vmatprep.subr.mxu0 0.0
    %653 = vmatpush1.msra.mxu0 0.0
    %654 = vmatprep.subr.mxu0 0.0
    %655 = vmatpush1.msra.mxu0 0.0
    %656 = vmatprep.subr.mxu0 0.0
    %657 = vmatpush1.msra.mxu0 0.0
    %658 = vmatprep.subr.mxu0 0.0
    %659 = vmatpush1.msra.mxu0 0.0
    %660 = vmatprep.subr.mxu0 0.0
    %661 = vmatpush1.msra.mxu0 0.0
    %662 = vmatprep.subr.mxu0 0.0
    %663 = vmatpush1.msra.mxu0 0.0
    %664 = vmatprep.subr.mxu0 0.0
    %665 = vmatpush1.msra.mxu0 0.0
    %666 = vmatprep.subr.mxu0 0.0
    %667 = vmatpush1.msra.mxu0 0.0
    %668 = vmatprep.subr.mxu0 0.0
    %669 = vmatpush1.msra.mxu0 0.0
    %670 = vmatprep.subr.mxu0 0.0
    %671 = vmatpush1.msra.mxu0 0.0
    %672 = vmatprep.subr.mxu0 0.0
    %673 = vmatpush1.msra.mxu0 0.0
    %674 = vmatprep.subr.mxu0 0.0
    %675 = vmatpush1.msra.mxu0 0.0
    %676 = vmatprep.subr.mxu0 0.0
    %677 = vmatpush1.msra.mxu0 0.0
    %678 = vmatprep.subr.mxu0 0.0
    %679 = vmatpush1.msra.mxu0 0.0
    %680 = vmatprep.subr.mxu0 0.0
    %681 = vmatpush1.msra.mxu0 0.0
    %682 = vmatprep.subr.mxu0 0.0
    %683 = vmatpush1.msra.mxu0 0.0
    %684 = vmatprep.subr.mxu0 0.0
    %685 = vmatpush1.msra.mxu0 0.0
    %686 = vmatprep.subr.mxu0 0.0
    %687 = vmatpush1.msra.mxu0 0.0
    %688 = vmatprep.subr.mxu0 0.0
    %689 = vmatpush1.msra.mxu0 0.0
    %690 = vmatprep.subr.mxu0 0.0
    %691 = vmatpush1.msra.mxu0 0.0
    %692 = vmatprep.subr.mxu0 0.0
    %693 = vmatpush1.msra.mxu0 0.0
    %694 = vmatprep.subr.mxu0 0.0
    %695 = vmatpush1.msra.mxu0 0.0
    %696 = vmatprep.subr.mxu0 0.0
    %697 = vmatpush1.msra.mxu0 0.0
    %698 = vmatprep.subr.mxu0 0.0
    %699 = vmatpush1.msra.mxu0 0.0
    %700 = vmatprep.subr.mxu0 0.0
    %701 = vmatpush1.msra.mxu0 0.0
    %702 = vmatprep.subr.mxu0 0.0
    %703 = vmatpush1.msra.mxu0 0.0
    %704 = vmatprep.subr.mxu0 0.0
    %705 = vmatpush1.msra.mxu0 0.0
    %706 = vmatprep.subr.mxu0 0.0
    %707 = vmatpush1.msra.mxu0 0.0
    %708 = vmatprep.subr.mxu0 0.0
    %709 = vmatpush1.msra.mxu0 0.0
    %710 = vmatprep.subr.mxu0 0.0
    %711 = vmatpush1.msra.mxu0 0.0
    %712 = vmatprep.subr.mxu0 0.0
    %713 = vmatpush1.msra.mxu0 0.0
    %714 = vmatprep.mubr.f32.mxu0 0.0
    %715 = vmatmul.mubr.f32.gmra.mrb[0].mxu0 %v648
    %v716 = vpop.f32.mrb[0].mxu0
    %v717 = vadd.f32 0.0, %v716
    %v718 = vpop.f32.mrb[0].mxu0
    %719 = vdwg.mxu0
    %720 = vrot.lane.b32.xlu0 %v227, 120
    %v721 = vpop.permute.xlu0 %720
    %722 = vrot.lane.b32.xlu0 %v306, 120
    %v723 = vpop.permute.xlu0 %722
    %v724 = vsel %vm397, %v721, 0
    %v726 = vsel %vm397, %v723, 0
    %728 = vmatprep.subr.mxu0 0.0
    %729 = vmatpush1.xpose.msra.mxu0 %v726
    %730 = vmatprep.subr.mxu0 0.0
    %731 = vmatpush1.xpose.msra.mxu0 0.0
    %732 = vmatprep.subr.mxu0 0.0
    %733 = vmatpush1.xpose.msra.mxu0 0.0
    %734 = vmatprep.subr.mxu0 0.0
    %735 = vmatpush1.xpose.msra.mxu0 0.0
    %736 = vmatprep.subr.mxu0 0.0
    %737 = vmatpush1.xpose.msra.mxu0 0.0
    %738 = vmatprep.subr.mxu0 0.0
    %739 = vmatpush1.xpose.msra.mxu0 0.0
    %740 = vmatprep.subr.mxu0 0.0
    %741 = vmatpush1.xpose.msra.mxu0 0.0
    %742 = vmatprep.subr.mxu0 0.0
    %743 = vmatpush1.xpose.msra.mxu0 0.0
    %744 = vmatprep.subr.mxu0 0.0
    %745 = vmatpush1.xpose.msra.mxu0 0.0
    %746 = vmatprep.subr.mxu0 0.0
    %747 = vmatpush1.xpose.msra.mxu0 0.0
    %748 = vmatprep.subr.mxu0 0.0
    %749 = vmatpush1.xpose.msra.mxu0 0.0
    %750 = vmatprep.subr.mxu0 0.0
    %751 = vmatpush1.xpose.msra.mxu0 0.0
    %752 = vmatprep.subr.mxu0 0.0
    %753 = vmatpush1.xpose.msra.mxu0 0.0
    %754 = vmatprep.subr.mxu0 0.0
    %755 = vmatpush1.xpose.msra.mxu0 0.0
    %756 = vmatprep.subr.mxu0 0.0
    %757 = vmatpush1.xpose.msra.mxu0 0.0
    %758 = vmatprep.subr.mxu0 0.0
    %759 = vmatpush1.xpose.msra.mxu0 0.0
    %760 = vmatprep.subr.mxu0 0.0
    %761 = vmatpush1.xpose.msra.mxu0 0.0
    %762 = vmatprep.subr.mxu0 0.0
    %763 = vmatpush1.xpose.msra.mxu0 0.0
    %764 = vmatprep.subr.mxu0 0.0
    %765 = vmatpush1.xpose.msra.mxu0 0.0
    %766 = vmatprep.subr.mxu0 0.0
    %767 = vmatpush1.xpose.msra.mxu0 0.0
    %768 = vmatprep.subr.mxu0 0.0
    %769 = vmatpush1.xpose.msra.mxu0 0.0
    %770 = vmatprep.subr.mxu0 0.0
    %771 = vmatpush1.xpose.msra.mxu0 0.0
    %772 = vmatprep.subr.mxu0 0.0
    %773 = vmatpush1.xpose.msra.mxu0 0.0
    %774 = vmatprep.subr.mxu0 0.0
    %775 = vmatpush1.xpose.msra.mxu0 0.0
    %776 = vmatprep.subr.mxu0 0.0
    %777 = vmatpush1.xpose.msra.mxu0 0.0
    %778 = vmatprep.subr.mxu0 0.0
    %779 = vmatpush1.xpose.msra.mxu0 0.0
    %780 = vmatprep.subr.mxu0 0.0
    %781 = vmatpush1.xpose.msra.mxu0 0.0
    %782 = vmatprep.subr.mxu0 0.0
    %783 = vmatpush1.xpose.msra.mxu0 0.0
    %784 = vmatprep.subr.mxu0 0.0
    %785 = vmatpush1.xpose.msra.mxu0 0.0
    %786 = vmatprep.subr.mxu0 0.0
    %787 = vmatpush1.xpose.msra.mxu0 0.0
    %788 = vmatprep.subr.mxu0 0.0
    %789 = vmatpush1.xpose.msra.mxu0 0.0
    %790 = vmatprep.subr.mxu0 0.0
    %791 = vmatpush1.xpose.msra.mxu0 0.0
    %792 = vmatprep.mubr.f32.mxu0 0.0
    %793 = vmatmul.mubr.f32.gmra.mrb[0].mxu0 %v724
    %v794 = vpop.f32.mrb[0].mxu0
    %v795 = vadd.f32 0.0, %v794
    %v796 = vpop.f32.mrb[0].mxu0
    %797 = vdwg.mxu0
    %798 = vrot.lane.b32.xlu0 %v232, 120
    %v799 = vpop.permute.xlu0 %798
    %800 = vrot.lane.b32.xlu0 %v311, 120
    %v801 = vpop.permute.xlu0 %800
    %v802 = vsel %vm397, %v799, 0
    %v804 = vsel %vm397, %v801, 0
    %806 = vmatprep.subr.mxu0 0.0
    %807 = vmatpush1.xpose.msra.mxu0 %v804
    %808 = vmatprep.subr.mxu0 0.0
    %809 = vmatpush1.xpose.msra.mxu0 0.0
    %810 = vmatprep.subr.mxu0 0.0
    %811 = vmatpush1.xpose.msra.mxu0 0.0
    %812 = vmatprep.subr.mxu0 0.0
    %813 = vmatpush1.xpose.msra.mxu0 0.0
    %814 = vmatprep.subr.mxu0 0.0
    %815 = vmatpush1.xpose.msra.mxu0 0.0
    %816 = vmatprep.subr.mxu0 0.0
    %817 = vmatpush1.xpose.msra.mxu0 0.0
    %818 = vmatprep.subr.mxu0 0.0
    %819 = vmatpush1.xpose.msra.mxu0 0.0
    %820 = vmatprep.subr.mxu0 0.0
    %821 = vmatpush1.xpose.msra.mxu0 0.0
    %822 = vmatprep.subr.mxu0 0.0
    %823 = vmatpush1.xpose.msra.mxu0 0.0
    %824 = vmatprep.subr.mxu0 0.0
    %825 = vmatpush1.xpose.msra.mxu0 0.0
    %826 = vmatprep.subr.mxu0 0.0
    %827 = vmatpush1.xpose.msra.mxu0 0.0
    %828 = vmatprep.subr.mxu0 0.0
    %829 = vmatpush1.xpose.msra.mxu0 0.0
    %830 = vmatprep.subr.mxu0 0.0
    %831 = vmatpush1.xpose.msra.mxu0 0.0
    %832 = vmatprep.subr.mxu0 0.0
    %833 = vmatpush1.xpose.msra.mxu0 0.0
    %834 = vmatprep.subr.mxu0 0.0
    %835 = vmatpush1.xpose.msra.mxu0 0.0
    %836 = vmatprep.subr.mxu0 0.0
    %837 = vmatpush1.xpose.msra.mxu0 0.0
    %838 = vmatprep.subr.mxu0 0.0
    %839 = vmatpush1.xpose.msra.mxu0 0.0
    %840 = vmatprep.subr.mxu0 0.0
    %841 = vmatpush1.xpose.msra.mxu0 0.0
    %842 = vmatprep.subr.mxu0 0.0
    %843 = vmatpush1.xpose.msra.mxu0 0.0
    %844 = vmatprep.subr.mxu0 0.0
    %845 = vmatpush1.xpose.msra.mxu0 0.0
    %846 = vmatprep.subr.mxu0 0.0
    %847 = vmatpush1.xpose.msra.mxu0 0.0
    %848 = vmatprep.subr.mxu0 0.0
    %849 = vmatpush1.xpose.msra.mxu0 0.0
    %850 = vmatprep.subr.mxu0 0.0
    %851 = vmatpush1.xpose.msra.mxu0 0.0
    %852 = vmatprep.subr.mxu0 0.0
    %853 = vmatpush1.xpose.msra.mxu0 0.0
    %854 = vmatprep.subr.mxu0 0.0
    %855 = vmatpush1.xpose.msra.mxu0 0.0
    %856 = vmatprep.subr.mxu0 0.0
    %857 = vmatpush1.xpose.msra.mxu0 0.0
    %858 = vmatprep.subr.mxu0 0.0
    %859 = vmatpush1.xpose.msra.mxu0 0.0
    %860 = vmatprep.subr.mxu0 0.0
    %861 = vmatpush1.xpose.msra.mxu0 0.0
    %862 = vmatprep.subr.mxu0 0.0
    %863 = vmatpush1.xpose.msra.mxu0 0.0
    %864 = vmatprep.subr.mxu0 0.0
    %865 = vmatpush1.xpose.msra.mxu0 0.0
    %866 = vmatprep.subr.mxu0 0.0
    %867 = vmatpush1.xpose.msra.mxu0 0.0
    %868 = vmatprep.subr.mxu0 0.0
    %869 = vmatpush1.xpose.msra.mxu0 0.0
    %870 = vmatprep.mubr.f32.mxu0 0.0
    %871 = vmatmul.mubr.f32.gmra.mrb[0].mxu0 %v802
    %v872 = vpop.f32.mrb[0].mxu0
    %v873 = vadd.f32 0.0, %v872
    %v874 = vpop.f32.mrb[0].mxu0
    %875 = vdwg.mxu0
    %v876 = vmul.f32 %v795, 0.17677669
    %v877 = vmul.f32 %v873, 0.17677669
    %v878 = vsel %vm397, %v876, -inf
    %879 = vmax.xlane.f32.xlu0 %v878
    %v880 = vpop.xlane.xlu0 %879
    %v881 = vsel %vm397, %v877, -inf
    %882 = vmax.xlane.f32.xlu0 %v881
    %v883 = vpop.xlane.xlu0 %882
    %v884 = vsub.f32 %v876, %v880
    %v885 = vsub.f32 %v877, %v883
    %v886 = vmul.f32 %v884, 1.442695
    %v887 = vpow.pop %v886
    %v888 = vmul.f32 %v885, 1.442695
    %v889 = vpow.pop %v888
    %v890 = vsel %vm397, %v887, 0.0
    %891 = vadd.xlane.f32.xlu0 %v890
    %v892 = vpop.xlane.xlu0 %891
    %v893 = vsel %vm397, %v889, 0.0
    %894 = vadd.xlane.f32.xlu0 %v893
    %v895 = vpop.xlane.xlu0 %894
    %v896 = vrcp.pop %v892
    %v897 = vrcp.pop %v895
    %v898 = vmul.f32 %v887, %v896
    %v899 = vmul.f32 %v889, %v897
    %901 = vrot.lane.b32.xlu0 %v385, 120
    %v902 = vpop.permute.xlu0 %901
    %v905 = vsel %vm397, %v898, 0
    %907 = vmatprep.subr.mxu0 0.0
    %908 = vmatpush1.msra.mxu0 %v902
    %909 = vmatprep.subr.mxu0 0.0
    %910 = vmatpush1.msra.mxu0 0.0
    %911 = vmatprep.subr.mxu0 0.0
    %912 = vmatpush1.msra.mxu0 0.0
    %913 = vmatprep.subr.mxu0 0.0
    %914 = vmatpush1.msra.mxu0 0.0
    %915 = vmatprep.subr.mxu0 0.0
    %916 = vmatpush1.msra.mxu0 0.0
    %917 = vmatprep.subr.mxu0 0.0
    %918 = vmatpush1.msra.mxu0 0.0
    %919 = vmatprep.subr.mxu0 0.0
    %920 = vmatpush1.msra.mxu0 0.0
    %921 = vmatprep.subr.mxu0 0.0
    %922 = vmatpush1.msra.mxu0 0.0
    %923 = vmatprep.subr.mxu0 0.0
    %924 = vmatpush1.msra.mxu0 0.0
    %925 = vmatprep.subr.mxu0 0.0
    %926 = vmatpush1.msra.mxu0 0.0
    %927 = vmatprep.subr.mxu0 0.0
    %928 = vmatpush1.msra.mxu0 0.0
    %929 = vmatprep.subr.mxu0 0.0
    %930 = vmatpush1.msra.mxu0 0.0
    %931 = vmatprep.subr.mxu0 0.0
    %932 = vmatpush1.msra.mxu0 0.0
    %933 = vmatprep.subr.mxu0 0.0
    %934 = vmatpush1.msra.mxu0 0.0
    %935 = vmatprep.subr.mxu0 0.0
    %936 = vmatpush1.msra.mxu0 0.0
    %937 = vmatprep.subr.mxu0 0.0
    %938 = vmatpush1.msra.mxu0 0.0
    %939 = vmatprep.subr.mxu0 0.0
    %940 = vmatpush1.msra.mxu0 0.0
    %941 = vmatprep.subr.mxu0 0.0
    %942 = vmatpush1.msra.mxu0 0.0
    %943 = vmatprep.subr.mxu0 0.0
    %944 = vmatpush1.msra.mxu0 0.0
    %945 = vmatprep.subr.mxu0 0.0
    %946 = vmatpush1.msra.mxu0 0.0
    %947 = vmatprep.subr.mxu0 0.0
    %948 = vmatpush1.msra.mxu0 0.0
    %949 = vmatprep.subr.mxu0 0.0
    %950 = vmatpush1.msra.mxu0 0.0
    %951 = vmatprep.subr.mxu0 0.0
    %952 = vmatpush1.msra.mxu0 0.0
    %953 = vmatprep.subr.mxu0 0.0
    %954 = vmatpush1.msra.mxu0 0.0
    %955 = vmatprep.subr.mxu0 0.0
    %956 = vmatpush1.msra.mxu0 0.0
    %957 = vmatprep.subr.mxu0 0.0
    %958 = vmatpush1.msra.mxu0 0.0
    %959 = vmatprep.subr.mxu0 0.0
    %960 = vmatpush1.msra.mxu0 0.0
    %961 = vmatprep.subr.mxu0 0.0
    %962 = vmatpush1.msra.mxu0 0.0
    %963 = vmatprep.subr.mxu0 0.0
    %964 = vmatpush1.msra.mxu0 0.0
    %965 = vmatprep.subr.mxu0 0.0
    %966 = vmatpush1.msra.mxu0 0.0
    %967 = vmatprep.subr.mxu0 0.0
    %968 = vmatpush1.msra.mxu0 0.0
    %969 = vmatprep.subr.mxu0 0.0
    %970 = vmatpush1.msra.mxu0 0.0
    %971 = vmatprep.mubr.f32.mxu0 0.0
    %972 = vmatmul.mubr.f32.gmra.mrb[0].mxu0 %v905
    %v973 = vpop.f32.mrb[0].mxu0
    %v974 = vadd.f32 0.0, %v973
    %v975 = vpop.f32.mrb[0].mxu0
    %976 = vdwg.mxu0
    %978 = vrot.lane.b32.xlu0 %v390, 120
    %v979 = vpop.permute.xlu0 %978
    %v982 = vsel %vm397, %v899, 0
    %984 = vmatprep.subr.mxu0 0.0
    %985 = vmatpush1.msra.mxu0 %v979
    %986 = vmatprep.subr.mxu0 0.0
    %987 = vmatpush1.msra.mxu0 0.0
    %988 = vmatprep.subr.mxu0 0.0
    %989 = vmatpush1.msra.mxu0 0.0
    %990 = vmatprep.subr.mxu0 0.0
    %991 = vmatpush1.msra.mxu0 0.0
    %992 = vmatprep.subr.mxu0 0.0
    %993 = vmatpush1.msra.mxu0 0.0
    %994 = vmatprep.subr.mxu0 0.0
    %995 = vmatpush1.msra.mxu0 0.0
    %996 = vmatprep.subr.mxu0 0.0
    %997 = vmatpush1.msra.mxu0 0.0
    %998 = vmatprep.subr.mxu0 0.0
    %999 = vmatpush1.msra.mxu0 0.0
    %1000 = vmatprep.subr.mxu0 0.0
    %1001 = vmatpush1.msra.mxu0 0.0
    %1002 = vmatprep.subr.mxu0 0.0
    %1003 = vmatpush1.msra.mxu0 0.0
    %1004 = vmatprep.subr.mxu0 0.0
    %1005 = vmatpush1.msra.mxu0 0.0
    %1006 = vmatprep.subr.mxu0 0.0
    %1007 = vmatpush1.msra.mxu0 0.0
    %1008 = vmatprep.subr.mxu0 0.0
    %1009 = vmatpush1.msra.mxu0 0.0
    %1010 = vmatprep.subr.mxu0 0.0
    %1011 = vmatpush1.msra.mxu0 0.0
    %1012 = vmatprep.subr.mxu0 0.0
    %1013 = vmatpush1.msra.mxu0 0.0
    %1014 = vmatprep.subr.mxu0 0.0
    %1015 = vmatpush1.msra.mxu0 0.0
    %1016 = vmatprep.subr.mxu0 0.0
    %1017 = vmatpush1.msra.mxu0 0.0
    %1018 = vmatprep.subr.mxu0 0.0
    %1019 = vmatpush1.msra.mxu0 0.0
    %1020 = vmatprep.subr.mxu0 0.0
    %1021 = vmatpush1.msra.mxu0 0.0
    %1022 = vmatprep.subr.mxu0 0.0
    %1023 = vmatpush1.msra.mxu0 0.0
    %1024 = vmatprep.subr.mxu0 0.0
    %1025 = vmatpush1.msra.mxu0 0.0
    %1026 = vmatprep.subr.mxu0 0.0
    %1027 = vmatpush1.msra.mxu0 0.0
    %1028 = vmatprep.subr.mxu0 0.0
    %1029 = vmatpush1.msra.mxu0 0.0
    %1030 = vmatprep.subr.mxu0 0.0
    %1031 = vmatpush1.msra.mxu0 0.0
    %1032 = vmatprep.subr.mxu0 0.0
    %1033 = vmatpush1.msra.mxu0 0.0
    %1034 = vmatprep.subr.mxu0 0.0
    %1035 = vmatpush1.msra.mxu0 0.0
    %1036 = vmatprep.subr.mxu0 0.0
    %1037 = vmatpush1.msra.mxu0 0.0
    %1038 = vmatprep.subr.mxu0 0.0
    %1039 = vmatpush1.msra.mxu0 0.0
    %1040 = vmatprep.subr.mxu0 0.0
    %1041 = vmatpush1.msra.mxu0 0.0
    %1042 = vmatprep.subr.mxu0 0.0
    %1043 = vmatpush1.msra.mxu0 0.0
    %1044 = vmatprep.subr.mxu0 0.0
    %1045 = vmatpush1.msra.mxu0 0.0
    %1046 = vmatprep.subr.mxu0 0.0
    %1047 = vmatpush1.msra.mxu0 0.0
    %1048 = vmatprep.mubr.f32.mxu0 0.0
    %1049 = vmatmul.mubr.f32.gmra.mrb[0].mxu0 %v982
    %v1050 = vpop.f32.mrb[0].mxu0
    %v1051 = vadd.f32 0.0, %v1050
    %v1052 = vpop.f32.mrb[0].mxu0
    %1053 = vdwg.mxu0
    %v1055 = vsel %vm397, %v974, 0
    %v1058 = vsel %vm397, %v1051, 0
    %1060 = vmatprep.subr.mxu0 0.0
    %1061 = vmatpush1.msra.mxu0 %v394
    %1062 = vmatprep.subr.mxu0 0.0
    %1063 = vmatpush1.msra.mxu0 0.0
    %1064 = vmatprep.subr.mxu0 0.0
    %1065 = vmatpush1.msra.mxu0 0.0
    %1066 = vmatprep.subr.mxu0 0.0
    %1067 = vmatpush1.msra.mxu0 0.0
    %1068 = vmatprep.subr.mxu0 0.0
    %1069 = vmatpush1.msra.mxu0 0.0
    %1070 = vmatprep.subr.mxu0 0.0
    %1071 = vmatpush1.msra.mxu0 0.0
    %1072 = vmatprep.subr.mxu0 0.0
    %1073 = vmatpush1.msra.mxu0 0.0
    %1074 = vmatprep.subr.mxu0 0.0
    %1075 = vmatpush1.msra.mxu0 0.0
    %1076 = vmatprep.subr.mxu0 0.0
    %1077 = vmatpush1.msra.mxu0 0.0
    %1078 = vmatprep.subr.mxu0 0.0
    %1079 = vmatpush1.msra.mxu0 0.0
    %1080 = vmatprep.subr.mxu0 0.0
    %1081 = vmatpush1.msra.mxu0 0.0
    %1082 = vmatprep.subr.mxu0 0.0
    %1083 = vmatpush1.msra.mxu0 0.0
    %1084 = vmatprep.subr.mxu0 0.0
    %1085 = vmatpush1.msra.mxu0 0.0
    %1086 = vmatprep.subr.mxu0 0.0
    %1087 = vmatpush1.msra.mxu0 0.0
    %1088 = vmatprep.subr.mxu0 0.0
    %1089 = vmatpush1.msra.mxu0 0.0
    %1090 = vmatprep.subr.mxu0 0.0
    %1091 = vmatpush1.msra.mxu0 0.0
    %1092 = vmatprep.subr.mxu0 0.0
    %1093 = vmatpush1.msra.mxu0 0.0
    %1094 = vmatprep.subr.mxu0 0.0
    %1095 = vmatpush1.msra.mxu0 0.0
    %1096 = vmatprep.subr.mxu0 0.0
    %1097 = vmatpush1.msra.mxu0 0.0
    %1098 = vmatprep.subr.mxu0 0.0
    %1099 = vmatpush1.msra.mxu0 0.0
    %1100 = vmatprep.subr.mxu0 0.0
    %1101 = vmatpush1.msra.mxu0 0.0
    %1102 = vmatprep.subr.mxu0 0.0
    %1103 = vmatpush1.msra.mxu0 0.0
    %1104 = vmatprep.subr.mxu0 0.0
    %1105 = vmatpush1.msra.mxu0 0.0
    %1106 = vmatprep.subr.mxu0 0.0
    %1107 = vmatpush1.msra.mxu0 0.0
    %1108 = vmatprep.subr.mxu0 0.0
    %1109 = vmatpush1.msra.mxu0 0.0
    %1110 = vmatprep.subr.mxu0 0.0
    %1111 = vmatpush1.msra.mxu0 0.0
    %1112 = vmatprep.subr.mxu0 0.0
    %1113 = vmatpush1.msra.mxu0 0.0
    %1114 = vmatprep.subr.mxu0 0.0
    %1115 = vmatpush1.msra.mxu0 0.0
    %1116 = vmatprep.subr.mxu0 0.0
    %1117 = vmatpush1.msra.mxu0 0.0
    %1118 = vmatprep.subr.mxu0 0.0
    %1119 = vmatpush1.msra.mxu0 0.0
    %1120 = vmatprep.subr.mxu0 0.0
    %1121 = vmatpush1.msra.mxu0 0.0
    %1122 = vmatprep.subr.mxu0 0.0
    %1123 = vmatpush1.msra.mxu0 0.0
    %1124 = vmatprep.mubr.f32.mxu0 0.0
    %1125 = vmatmul.mubr.f32.gmra.mrb[0].mxu0 %v1055
    %v1126 = vpop.f32.mrb[0].mxu0
    %v1127 = vadd.f32 0.0, %v1126
    %v1128 = vpop.f32.mrb[0].mxu0
    %1129 = vmatprep.mubr.f32.mxu0 0.0
    %1130 = vmatmul.mubr.f32.gmra.mrb[0].mxu0 %v1058
    %v1131 = vpop.f32.mrb[0].mxu0
    %v1132 = vadd.f32 0.0, %v1131
    %v1133 = vpop.f32.mrb[0].mxu0
    %1134 = vdwg.mxu0
    %v1136 = vsel %vm397, %v644, 0
    %v1139 = vsel %vm397, %v717, 0
    %1141 = vmatprep.subr.mxu0 0.0
    %1142 = vmatpush1.msra.mxu0 %v393
    %1143 = vmatprep.subr.mxu0 0.0
    %1144 = vmatpush1.msra.mxu0 0.0
    %1145 = vmatprep.subr.mxu0 0.0
    %1146 = vmatpush1.msra.mxu0 0.0
    %1147 = vmatprep.subr.mxu0 0.0
    %1148 = vmatpush1.msra.mxu0 0.0
    %1149 = vmatprep.subr.mxu0 0.0
    %1150 = vmatpush1.msra.mxu0 0.0
    %1151 = vmatprep.subr.mxu0 0.0
    %1152 = vmatpush1.msra.mxu0 0.0
    %1153 = vmatprep.subr.mxu0 0.0
    %1154 = vmatpush1.msra.mxu0 0.0
    %1155 = vmatprep.subr.mxu0 0.0
    %1156 = vmatpush1.msra.mxu0 0.0
    %1157 = vmatprep.subr.mxu0 0.0
    %1158 = vmatpush1.msra.mxu0 0.0
    %1159 = vmatprep.subr.mxu0 0.0
    %1160 = vmatpush1.msra.mxu0 0.0
    %1161 = vmatprep.subr.mxu0 0.0
    %1162 = vmatpush1.msra.mxu0 0.0
    %1163 = vmatprep.subr.mxu0 0.0
    %1164 = vmatpush1.msra.mxu0 0.0
    %1165 = vmatprep.subr.mxu0 0.0
    %1166 = vmatpush1.msra.mxu0 0.0
    %1167 = vmatprep.subr.mxu0 0.0
    %1168 = vmatpush1.msra.mxu0 0.0
    %1169 = vmatprep.subr.mxu0 0.0
    %1170 = vmatpush1.msra.mxu0 0.0
    %1171 = vmatprep.subr.mxu0 0.0
    %1172 = vmatpush1.msra.mxu0 0.0
    %1173 = vmatprep.subr.mxu0 0.0
    %1174 = vmatpush1.msra.mxu0 0.0
    %1175 = vmatprep.subr.mxu0 0.0
    %1176 = vmatpush1.msra.mxu0 0.0
    %1177 = vmatprep.subr.mxu0 0.0
    %1178 = vmatpush1.msra.mxu0 0.0
    %1179 = vmatprep.subr.mxu0 0.0
    %1180 = vmatpush1.msra.mxu0 0.0
    %1181 = vmatprep.subr.mxu0 0.0
    %1182 = vmatpush1.msra.mxu0 0.0
    %1183 = vmatprep.subr.mxu0 0.0
    %1184 = vmatpush1.msra.mxu0 0.0
    %1185 = vmatprep.subr.mxu0 0.0
    %1186 = vmatpush1.msra.mxu0 0.0
    %1187 = vmatprep.subr.mxu0 0.0
    %1188 = vmatpush1.msra.mxu0 0.0
    %1189 = vmatprep.subr.mxu0 0.0
    %1190 = vmatpush1.msra.mxu0 0.0
    %1191 = vmatprep.subr.mxu0 0.0
    %1192 = vmatpush1.msra.mxu0 0.0
    %1193 = vmatprep.subr.mxu0 0.0
    %1194 = vmatpush1.msra.mxu0 0.0
    %1195 = vmatprep.subr.mxu0 0.0
    %1196 = vmatpush1.msra.mxu0 0.0
    %1197 = vmatprep.subr.mxu0 0.0
    %1198 = vmatpush1.msra.mxu0 0.0
    %1199 = vmatprep.subr.mxu0 0.0
    %1200 = vmatpush1.msra.mxu0 0.0
    %1201 = vmatprep.subr.mxu0 0.0
    %1202 = vmatpush1.msra.mxu0 0.0
    %1203 = vmatprep.subr.mxu0 0.0
    %1204 = vmatpush1.msra.mxu0 0.0
    %1205 = vmatprep.mubr.f32.mxu0 0.0
    %1206 = vmatmul.mubr.f32.gmra.mrb[0].mxu0 %v1136
    %v1207 = vpop.f32.mrb[0].mxu0
    %v1208 = vadd.f32 %v1127, %v1207
    %v1209 = vpop.f32.mrb[0].mxu0
    %1210 = vmatprep.mubr.f32.mxu0 0.0
    %1211 = vmatmul.mubr.f32.gmra.mrb[0].mxu0 %v1139
    %v1212 = vpop.f32.mrb[0].mxu0
    %v1213 = vadd.f32 %v1132, %v1212
    %v1214 = vpop.f32.mrb[0].mxu0
    %1215 = vdwg.mxu0
    %1216 = vrot.lane.b32.xlu0 %v227, 112
    %v1217 = vpop.permute.xlu0 %1216
    %1218 = vrot.lane.b32.xlu0 %v306, 112
    %v1219 = vpop.permute.xlu0 %1218
    %v1220 = vsel %vm397, %v1217, 0
    %v1222 = vsel %vm397, %v1219, 0
    %1224 = vmatprep.subr.mxu0 0.0
    %1225 = vmatpush1.xpose.msra.mxu0 %v1222
    %1226 = vmatprep.subr.mxu0 0.0
    %1227 = vmatpush1.xpose.msra.mxu0 0.0
    %1228 = vmatprep.subr.mxu0 0.0
    %1229 = vmatpush1.xpose.msra.mxu0 0.0
    %1230 = vmatprep.subr.mxu0 0.0
    %1231 = vmatpush1.xpose.msra.mxu0 0.0
    %1232 = vmatprep.subr.mxu0 0.0
    %1233 = vmatpush1.xpose.msra.mxu0 0.0
    %1234 = vmatprep.subr.mxu0 0.0
    %1235 = vmatpush1.xpose.msra.mxu0 0.0
    %1236 = vmatprep.subr.mxu0 0.0
    %1237 = vmatpush1.xpose.msra.mxu0 0.0
    %1238 = vmatprep.subr.mxu0 0.0
    %1239 = vmatpush1.xpose.msra.mxu0 0.0
    %1240 = vmatprep.subr.mxu0 0.0
    %1241 = vmatpush1.xpose.msra.mxu0 0.0
    %1242 = vmatprep.subr.mxu0 0.0
    %1243 = vmatpush1.xpose.msra.mxu0 0.0
    %1244 = vmatprep.subr.mxu0 0.0
    %1245 = vmatpush1.xpose.msra.mxu0 0.0
    %1246 = vmatprep.subr.mxu0 0.0
    %1247 = vmatpush1.xpose.msra.mxu0 0.0
    %1248 = vmatprep.subr.mxu0 0.0
    %1249 = vmatpush1.xpose.msra.mxu0 0.0
    %1250 = vmatprep.subr.mxu0 0.0
    %1251 = vmatpush1.xpose.msra.mxu0 0.0
    %1252 = vmatprep.subr.mxu0 0.0
    %1253 = vmatpush1.xpose.msra.mxu0 0.0
    %1254 = vmatprep.subr.mxu0 0.0
    %1255 = vmatpush1.xpose.msra.mxu0 0.0
    %1256 = vmatprep.subr.mxu0 0.0
    %1257 = vmatpush1.xpose.msra.mxu0 0.0
    %1258 = vmatprep.subr.mxu0 0.0
    %1259 = vmatpush1.xpose.msra.mxu0 0.0
    %1260 = vmatprep.subr.mxu0 0.0
    %1261 = vmatpush1.xpose.msra.mxu0 0.0
    %1262 = vmatprep.subr.mxu0 0.0
    %1263 = vmatpush1.xpose.msra.mxu0 0.0
    %1264 = vmatprep.subr.mxu0 0.0
    %1265 = vmatpush1.xpose.msra.mxu0 0.0
    %1266 = vmatprep.subr.mxu0 0.0
    %1267 = vmatpush1.xpose.msra.mxu0 0.0
    %1268 = vmatprep.subr.mxu0 0.0
    %1269 = vmatpush1.xpose.msra.mxu0 0.0
    %1270 = vmatprep.subr.mxu0 0.0
    %1271 = vmatpush1.xpose.msra.mxu0 0.0
    %1272 = vmatprep.subr.mxu0 0.0
    %1273 = vmatpush1.xpose.msra.mxu0 0.0
    %1274 = vmatprep.subr.mxu0 0.0
    %1275 = vmatpush1.xpose.msra.mxu0 0.0
    %1276 = vmatprep.subr.mxu0 0.0
    %1277 = vmatpush1.xpose.msra.mxu0 0.0
    %1278 = vmatprep.subr.mxu0 0.0
    %1279 = vmatpush1.xpose.msra.mxu0 0.0
    %1280 = vmatprep.subr.mxu0 0.0
    %1281 = vmatpush1.xpose.msra.mxu0 0.0
    %1282 = vmatprep.subr.mxu0 0.0
    %1283 = vmatpush1.xpose.msra.mxu0 0.0
    %1284 = vmatprep.subr.mxu0 0.0
    %1285 = vmatpush1.xpose.msra.mxu0 0.0
    %1286 = vmatprep.subr.mxu0 0.0
    %1287 = vmatpush1.xpose.msra.mxu0 0.0
    %1288 = vmatprep.mubr.f32.mxu0 0.0
    %1289 = vmatmul.mubr.f32.gmra.mrb[0].mxu0 %v1220
    %v1290 = vpop.f32.mrb[0].mxu0
    %v1291 = vadd.f32 0.0, %v1290
    %v1292 = vpop.f32.mrb[0].mxu0
    %1293 = vdwg.mxu0
    %1294 = vrot.lane.b32.xlu0 %v232, 112
    %v1295 = vpop.permute.xlu0 %1294
    %1296 = vrot.lane.b32.xlu0 %v311, 112
    %v1297 = vpop.permute.xlu0 %1296
    %v1298 = vsel %vm397, %v1295, 0
    %v1300 = vsel %vm397, %v1297, 0
    %1302 = vmatprep.subr.mxu0 0.0
    %1303 = vmatpush1.xpose.msra.mxu0 %v1300
    %1304 = vmatprep.subr.mxu0 0.0
    %1305 = vmatpush1.xpose.msra.mxu0 0.0
    %1306 = vmatprep.subr.mxu0 0.0
    %1307 = vmatpush1.xpose.msra.mxu0 0.0
    %1308 = vmatprep.subr.mxu0 0.0
    %1309 = vmatpush1.xpose.msra.mxu0 0.0
    %1310 = vmatprep.subr.mxu0 0.0
    %1311 = vmatpush1.xpose.msra.mxu0 0.0
    %1312 = vmatprep.subr.mxu0 0.0
    %1313 = vmatpush1.xpose.msra.mxu0 0.0
    %1314 = vmatprep.subr.mxu0 0.0
    %1315 = vmatpush1.xpose.msra.mxu0 0.0
    %1316 = vmatprep.subr.mxu0 0.0
    %1317 = vmatpush1.xpose.msra.mxu0 0.0
    %1318 = vmatprep.subr.mxu0 0.0
    %1319 = vmatpush1.xpose.msra.mxu0 0.0
    %1320 = vmatprep.subr.mxu0 0.0
    %1321 = vmatpush1.xpose.msra.mxu0 0.0
    %1322 = vmatprep.subr.mxu0 0.0
    %1323 = vmatpush1.xpose.msra.mxu0 0.0
    %1324 = vmatprep.subr.mxu0 0.0
    %1325 = vmatpush1.xpose.msra.mxu0 0.0
    %1326 = vmatprep.subr.mxu0 0.0
    %1327 = vmatpush1.xpose.msra.mxu0 0.0
    %1328 = vmatprep.subr.mxu0 0.0
    %1329 = vmatpush1.xpose.msra.mxu0 0.0
    %1330 = vmatprep.subr.mxu0 0.0
    %1331 = vmatpush1.xpose.msra.mxu0 0.0
    %1332 = vmatprep.subr.mxu0 0.0
    %1333 = vmatpush1.xpose.msra.mxu0 0.0
    %1334 = vmatprep.subr.mxu0 0.0
    %1335 = vmatpush1.xpose.msra.mxu0 0.0
    %1336 = vmatprep.subr.mxu0 0.0
    %1337 = vmatpush1.xpose.msra.mxu0 0.0
    %1338 = vmatprep.subr.mxu0 0.0
    %1339 = vmatpush1.xpose.msra.mxu0 0.0
    %1340 = vmatprep.subr.mxu0 0.0
    %1341 = vmatpush1.xpose.msra.mxu0 0.0
    %1342 = vmatprep.subr.mxu0 0.0
    %1343 = vmatpush1.xpose.msra.mxu0 0.0
    %1344 = vmatprep.subr.mxu0 0.0
    %1345 = vmatpush1.xpose.msra.mxu0 0.0
    %1346 = vmatprep.subr.mxu0 0.0
    %1347 = vmatpush1.xpose.msra.mxu0 0.0
    %1348 = vmatprep.subr.mxu0 0.0
    %1349 = vmatpush1.xpose.msra.mxu0 0.0
    %1350 = vmatprep.subr.mxu0 0.0
    %1351 = vmatpush1.xpose.msra.mxu0 0.0
    %1352 = vmatprep.subr.mxu0 0.0
    %1353 = vmatpush1.xpose.msra.mxu0 0.0
    %1354 = vmatprep.subr.mxu0 0.0
    %1355 = vmatpush1.xpose.msra.mxu0 0.0
    %1356 = vmatprep.subr.mxu0 0.0
    %1357 = vmatpush1.xpose.msra.mxu0 0.0
    %1358 = vmatprep.subr.mxu0 0.0
    %1359 = vmatpush1.xpose.msra.mxu0 0.0
    %1360 = vmatprep.subr.mxu0 0.0
    %1361 = vmatpush1.xpose.msra.mxu0 0.0
    %1362 = vmatprep.subr.mxu0 0.0
    %1363 = vmatpush1.xpose.msra.mxu0 0.0
    %1364 = vmatprep.subr.mxu0 0.0
    %1365 = vmatpush1.xpose.msra.mxu0 0.0
    %1366 = vmatprep.mubr.f32.mxu0 0.0
    %1367 = vmatmul.mubr.f32.gmra.mrb[0].mxu0 %v1298
    %v1368 = vpop.f32.mrb[0].mxu0
    %v1369 = vadd.f32 0.0, %v1368
    %v1370 = vpop.f32.mrb[0].mxu0
    %1371 = vdwg.mxu0
    %v1372 = vmul.f32 %v1291, 0.17677669
    %v1373 = vmul.f32 %v1369, 0.17677669
    %v1374 = vsel %vm397, %v1372, -inf
    %1375 = vmax.xlane.f32.xlu0 %v1374
    %v1376 = vpop.xlane.xlu0 %1375
    %v1377 = vsel %vm397, %v1373, -inf
    %1378 = vmax.xlane.f32.xlu0 %v1377
    %v1379 = vpop.xlane.xlu0 %1378
    %v1380 = vsub.f32 %v1372, %v1376
    %v1381 = vsub.f32 %v1373, %v1379
    %v1382 = vmul.f32 %v1380, 1.442695
    %v1383 = vpow.pop %v1382
    %v1384 = vmul.f32 %v1381, 1.442695
    %v1385 = vpow.pop %v1384
    %v1386 = vsel %vm397, %v1383, 0.0
    %1387 = vadd.xlane.f32.xlu0 %v1386
    %v1388 = vpop.xlane.xlu0 %1387
    %v1389 = vsel %vm397, %v1385, 0.0
    %1390 = vadd.xlane.f32.xlu0 %v1389
    %v1391 = vpop.xlane.xlu0 %1390
    %v1392 = vrcp.pop %v1388
    %v1393 = vrcp.pop %v1391
    %v1394 = vmul.f32 %v1383, %v1392
    %v1395 = vmul.f32 %v1385, %v1393
    %1396 = vrot.lane.b32.xlu0 %v385, 112
    %v1397 = vpop.permute.xlu0 %1396
    %v1400 = vsel %vm397, %v1394, 0
    %1402 = vmatprep.subr.mxu0 0.0
    %1403 = vmatpush1.msra.mxu0 %v1397
    %1404 = vmatprep.subr.mxu0 0.0
    %1405 = vmatpush1.msra.mxu0 0.0
    %1406 = vmatprep.subr.mxu0 0.0
    %1407 = vmatpush1.msra.mxu0 0.0
    %1408 = vmatprep.subr.mxu0 0.0
    %1409 = vmatpush1.msra.mxu0 0.0
    %1410 = vmatprep.subr.mxu0 0.0
    %1411 = vmatpush1.msra.mxu0 0.0
    %1412 = vmatprep.subr.mxu0 0.0
    %1413 = vmatpush1.msra.mxu0 0.0
    %1414 = vmatprep.subr.mxu0 0.0
    %1415 = vmatpush1.msra.mxu0 0.0
    %1416 = vmatprep.subr.mxu0 0.0
    %1417 = vmatpush1.msra.mxu0 0.0
    %1418 = vmatprep.subr.mxu0 0.0
    %1419 = vmatpush1.msra.mxu0 0.0
    %1420 = vmatprep.subr.mxu0 0.0
    %1421 = vmatpush1.msra.mxu0 0.0
    %1422 = vmatprep.subr.mxu0 0.0
    %1423 = vmatpush1.msra.mxu0 0.0
    %1424 = vmatprep.subr.mxu0 0.0
    %1425 = vmatpush1.msra.mxu0 0.0
    %1426 = vmatprep.subr.mxu0 0.0
    %1427 = vmatpush1.msra.mxu0 0.0
    %1428 = vmatprep.subr.mxu0 0.0
    %1429 = vmatpush1.msra.mxu0 0.0
    %1430 = vmatprep.subr.mxu0 0.0
    %1431 = vmatpush1.msra.mxu0 0.0
    %1432 = vmatprep.subr.mxu0 0.0
    %1433 = vmatpush1.msra.mxu0 0.0
    %1434 = vmatprep.subr.mxu0 0.0
    %1435 = vmatpush1.msra.mxu0 0.0
    %1436 = vmatprep.subr.mxu0 0.0
    %1437 = vmatpush1.msra.mxu0 0.0
    %1438 = vmatprep.subr.mxu0 0.0
    %1439 = vmatpush1.msra.mxu0 0.0
    %1440 = vmatprep.subr.mxu0 0.0
    %1441 = vmatpush1.msra.mxu0 0.0
    %1442 = vmatprep.subr.mxu0 0.0
    %1443 = vmatpush1.msra.mxu0 0.0
    %1444 = vmatprep.subr.mxu0 0.0
    %1445 = vmatpush1.msra.mxu0 0.0
    %1446 = vmatprep.subr.mxu0 0.0
    %1447 = vmatpush1.msra.mxu0 0.0
    %1448 = vmatprep.subr.mxu0 0.0
    %1449 = vmatpush1.msra.mxu0 0.0
    %1450 = vmatprep.subr.mxu0 0.0
    %1451 = vmatpush1.msra.mxu0 0.0
    %1452 = vmatprep.subr.mxu0 0.0
    %1453 = vmatpush1.msra.mxu0 0.0
    %1454 = vmatprep.subr.mxu0 0.0
    %1455 = vmatpush1.msra.mxu0 0.0
    %1456 = vmatprep.subr.mxu0 0.0
    %1457 = vmatpush1.msra.mxu0 0.0
    %1458 = vmatprep.subr.mxu0 0.0
    %1459 = vmatpush1.msra.mxu0 0.0
    %1460 = vmatprep.subr.mxu0 0.0
    %1461 = vmatpush1.msra.mxu0 0.0
    %1462 = vmatprep.subr.mxu0 0.0
    %1463 = vmatpush1.msra.mxu0 0.0
    %1464 = vmatprep.subr.mxu0 0.0
    %1465 = vmatpush1.msra.mxu0 0.0
    %1466 = vmatprep.mubr.f32.mxu0 0.0
    %1467 = vmatmul.mubr.f32.gmra.mrb[0].mxu0 %v1400
    %v1468 = vpop.f32.mrb[0].mxu0
    %v1469 = vadd.f32 0.0, %v1468
    %v1470 = vpop.f32.mrb[0].mxu0
    %1471 = vdwg.mxu0
    %1472 = vrot.lane.b32.xlu0 %v390, 112
    %v1473 = vpop.permute.xlu0 %1472
    %v1476 = vsel %vm397, %v1395, 0
    %1478 = vmatprep.subr.mxu0 0.0
    %1479 = vmatpush1.msra.mxu0 %v1473
    %1480 = vmatprep.subr.mxu0 0.0
    %1481 = vmatpush1.msra.mxu0 0.0
    %1482 = vmatprep.subr.mxu0 0.0
    %1483 = vmatpush1.msra.mxu0 0.0
    %1484 = vmatprep.subr.mxu0 0.0
    %1485 = vmatpush1.msra.mxu0 0.0
    %1486 = vmatprep.subr.mxu0 0.0
    %1487 = vmatpush1.msra.mxu0 0.0
    %1488 = vmatprep.subr.mxu0 0.0
    %1489 = vmatpush1.msra.mxu0 0.0
    %1490 = vmatprep.subr.mxu0 0.0
    %1491 = vmatpush1.msra.mxu0 0.0
    %1492 = vmatprep.subr.mxu0 0.0
    %1493 = vmatpush1.msra.mxu0 0.0
    %1494 = vmatprep.subr.mxu0 0.0
    %1495 = vmatpush1.msra.mxu0 0.0
    %1496 = vmatprep.subr.mxu0 0.0
    %1497 = vmatpush1.msra.mxu0 0.0
    %1498 = vmatprep.subr.mxu0 0.0
    %1499 = vmatpush1.msra.mxu0 0.0
    %1500 = vmatprep.subr.mxu0 0.0
    %1501 = vmatpush1.msra.mxu0 0.0
    %1502 = vmatprep.subr.mxu0 0.0
    %1503 = vmatpush1.msra.mxu0 0.0
    %1504 = vmatprep.subr.mxu0 0.0
    %1505 = vmatpush1.msra.mxu0 0.0
    %1506 = vmatprep.subr.mxu0 0.0
    %1507 = vmatpush1.msra.mxu0 0.0
    %1508 = vmatprep.subr.mxu0 0.0
    %1509 = vmatpush1.msra.mxu0 0.0
    %1510 = vmatprep.subr.mxu0 0.0
    %1511 = vmatpush1.msra.mxu0 0.0
    %1512 = vmatprep.subr.mxu0 0.0
    %1513 = vmatpush1.msra.mxu0 0.0
    %1514 = vmatprep.subr.mxu0 0.0
    %1515 = vmatpush1.msra.mxu0 0.0
    %1516 = vmatprep.subr.mxu0 0.0
    %1517 = vmatpush1.msra.mxu0 0.0
    %1518 = vmatprep.subr.mxu0 0.0
    %1519 = vmatpush1.msra.mxu0 0.0
    %1520 = vmatprep.subr.mxu0 0.0
    %1521 = vmatpush1.msra.mxu0 0.0
    %1522 = vmatprep.subr.mxu0 0.0
    %1523 = vmatpush1.msra.mxu0 0.0
    %1524 = vmatprep.subr.mxu0 0.0
    %1525 = vmatpush1.msra.mxu0 0.0
    %1526 = vmatprep.subr.mxu0 0.0
    %1527 = vmatpush1.msra.mxu0 0.0
    %1528 = vmatprep.subr.mxu0 0.0
    %1529 = vmatpush1.msra.mxu0 0.0
    %1530 = vmatprep.subr.mxu0 0.0
    %1531 = vmatpush1.msra.mxu0 0.0
    %1532 = vmatprep.subr.mxu0 0.0
    %1533 = vmatpush1.msra.mxu0 0.0
    %1534 = vmatprep.subr.mxu0 0.0
    %1535 = vmatpush1.msra.mxu0 0.0
    %1536 = vmatprep.subr.mxu0 0.0
    %1537 = vmatpush1.msra.mxu0 0.0
    %1538 = vmatprep.subr.mxu0 0.0
    %1539 = vmatpush1.msra.mxu0 0.0
    %1540 = vmatprep.subr.mxu0 0.0
    %1541 = vmatpush1.msra.mxu0 0.0
    %1542 = vmatprep.mubr.f32.mxu0 0.0
    %1543 = vmatmul.mubr.f32.gmra.mrb[0].mxu0 %v1476
    %v1544 = vpop.f32.mrb[0].mxu0
    %v1545 = vadd.f32 0.0, %v1544
    %v1546 = vpop.f32.mrb[0].mxu0
    %1547 = vdwg.mxu0
    %v1549 = vsel %vm397, %v1469, 0
    %v1552 = vsel %vm397, %v1545, 0
    %1554 = vmatprep.subr.mxu0 0.0
    %1555 = vmatpush1.msra.mxu0 %v395
    %1556 = vmatprep.subr.mxu0 0.0
    %1557 = vmatpush1.msra.mxu0 0.0
    %1558 = vmatprep.subr.mxu0 0.0
    %1559 = vmatpush1.msra.mxu0 0.0
    %1560 = vmatprep.subr.mxu0 0.0
    %1561 = vmatpush1.msra.mxu0 0.0
    %1562 = vmatprep.subr.mxu0 0.0
    %1563 = vmatpush1.msra.mxu0 0.0
    %1564 = vmatprep.subr.mxu0 0.0
    %1565 = vmatpush1.msra.mxu0 0.0
    %1566 = vmatprep.subr.mxu0 0.0
    %1567 = vmatpush1.msra.mxu0 0.0
    %1568 = vmatprep.subr.mxu0 0.0
    %1569 = vmatpush1.msra.mxu0 0.0
    %1570 = vmatprep.subr.mxu0 0.0
    %1571 = vmatpush1.msra.mxu0 0.0
    %1572 = vmatprep.subr.mxu0 0.0
    %1573 = vmatpush1.msra.mxu0 0.0
    %1574 = vmatprep.subr.mxu0 0.0
    %1575 = vmatpush1.msra.mxu0 0.0
    %1576 = vmatprep.subr.mxu0 0.0
    %1577 = vmatpush1.msra.mxu0 0.0
    %1578 = vmatprep.subr.mxu0 0.0
    %1579 = vmatpush1.msra.mxu0 0.0
    %1580 = vmatprep.subr.mxu0 0.0
    %1581 = vmatpush1.msra.mxu0 0.0
    %1582 = vmatprep.subr.mxu0 0.0
    %1583 = vmatpush1.msra.mxu0 0.0
    %1584 = vmatprep.subr.mxu0 0.0
    %1585 = vmatpush1.msra.mxu0 0.0
    %1586 = vmatprep.subr.mxu0 0.0
    %1587 = vmatpush1.msra.mxu0 0.0
    %1588 = vmatprep.subr.mxu0 0.0
    %1589 = vmatpush1.msra.mxu0 0.0
    %1590 = vmatprep.subr.mxu0 0.0
    %1591 = vmatpush1.msra.mxu0 0.0
    %1592 = vmatprep.subr.mxu0 0.0
    %1593 = vmatpush1.msra.mxu0 0.0
    %1594 = vmatprep.subr.mxu0 0.0
    %1595 = vmatpush1.msra.mxu0 0.0
    %1596 = vmatprep.subr.mxu0 0.0
    %1597 = vmatpush1.msra.mxu0 0.0
    %1598 = vmatprep.subr.mxu0 0.0
    %1599 = vmatpush1.msra.mxu0 0.0
    %1600 = vmatprep.subr.mxu0 0.0
    %1601 = vmatpush1.msra.mxu0 0.0
    %1602 = vmatprep.subr.mxu0 0.0
    %1603 = vmatpush1.msra.mxu0 0.0
    %1604 = vmatprep.subr.mxu0 0.0
    %1605 = vmatpush1.msra.mxu0 0.0
    %1606 = vmatprep.subr.mxu0 0.0
    %1607 = vmatpush1.msra.mxu0 0.0
    %1608 = vmatprep.subr.mxu0 0.0
    %1609 = vmatpush1.msra.mxu0 0.0
    %1610 = vmatprep.subr.mxu0 0.0
    %1611 = vmatpush1.msra.mxu0 0.0
    %1612 = vmatprep.subr.mxu0 0.0
    %1613 = vmatpush1.msra.mxu0 0.0
    %1614 = vmatprep.subr.mxu0 0.0
    %1615 = vmatpush1.msra.mxu0 0.0
    %1616 = vmatprep.subr.mxu0 0.0
    %1617 = vmatpush1.msra.mxu0 0.0
    %1618 = vmatprep.mubr.f32.mxu0 0.0
    %1619 = vmatmul.mubr.f32.gmra.mrb[0].mxu0 %v1549
    %v1620 = vpop.f32.mrb[0].mxu0
    %v1621 = vadd.f32 0.0, %v1620
    %v1622 = vpop.f32.mrb[0].mxu0
    %1623 = vmatprep.mubr.f32.mxu0 0.0
    %1624 = vmatmul.mubr.f32.gmra.mrb[0].mxu0 %v1552
    %v1625 = vpop.f32.mrb[0].mxu0
    %v1626 = vadd.f32 0.0, %v1625
    %v1627 = vpop.f32.mrb[0].mxu0
    %1628 = vdwg.mxu0
    %v1629 = vadd.f32 %v1208, %v1621
    %v1630 = vadd.f32 %v1213, %v1626
    %1631 = vrot.lane.b32.xlu0 %v227, 104
    %v1632 = vpop.permute.xlu0 %1631
    %1633 = vrot.lane.b32.xlu0 %v306, 104
    %v1634 = vpop.permute.xlu0 %1633
    %v1635 = vsel %vm397, %v1632, 0
    %v1637 = vsel %vm397, %v1634, 0
    %1639 = vmatprep.subr.mxu0 0.0
    %1640 = vmatpush1.xpose.msra.mxu0 %v1637
    %1641 = vmatprep.subr.mxu0 0.0
    %1642 = vmatpush1.xpose.msra.mxu0 0.0
    %1643 = vmatprep.subr.mxu0 0.0
    %1644 = vmatpush1.xpose.msra.mxu0 0.0
    %1645 = vmatprep.subr.mxu0 0.0
    %1646 = vmatpush1.xpose.msra.mxu0 0.0
    %1647 = vmatprep.subr.mxu0 0.0
    %1648 = vmatpush1.xpose.msra.mxu0 0.0
    %1649 = vmatprep.subr.mxu0 0.0
    %1650 = vmatpush1.xpose.msra.mxu0 0.0
    %1651 = vmatprep.subr.mxu0 0.0
    %1652 = vmatpush1.xpose.msra.mxu0 0.0
    %1653 = vmatprep.subr.mxu0 0.0
    %1654 = vmatpush1.xpose.msra.mxu0 0.0
    %1655 = vmatprep.subr.mxu0 0.0
    %1656 = vmatpush1.xpose.msra.mxu0 0.0
    %1657 = vmatprep.subr.mxu0 0.0
    %1658 = vmatpush1.xpose.msra.mxu0 0.0
    %1659 = vmatprep.subr.mxu0 0.0
    %1660 = vmatpush1.xpose.msra.mxu0 0.0
    %1661 = vmatprep.subr.mxu0 0.0
    %1662 = vmatpush1.xpose.msra.mxu0 0.0
    %1663 = vmatprep.subr.mxu0 0.0
    %1664 = vmatpush1.xpose.msra.mxu0 0.0
    %1665 = vmatprep.subr.mxu0 0.0
    %1666 = vmatpush1.xpose.msra.mxu0 0.0
    %1667 = vmatprep.subr.mxu0 0.0
    %1668 = vmatpush1.xpose.msra.mxu0 0.0
    %1669 = vmatprep.subr.mxu0 0.0
    %1670 = vmatpush1.xpose.msra.mxu0 0.0
    %1671 = vmatprep.subr.mxu0 0.0
    %1672 = vmatpush1.xpose.msra.mxu0 0.0
    %1673 = vmatprep.subr.mxu0 0.0
    %1674 = vmatpush1.xpose.msra.mxu0 0.0
    %1675 = vmatprep.subr.mxu0 0.0
    %1676 = vmatpush1.xpose.msra.mxu0 0.0
    %1677 = vmatprep.subr.mxu0 0.0
    %1678 = vmatpush1.xpose.msra.mxu0 0.0
    %1679 = vmatprep.subr.mxu0 0.0
    %1680 = vmatpush1.xpose.msra.mxu0 0.0
    %1681 = vmatprep.subr.mxu0 0.0
    %1682 = vmatpush1.xpose.msra.mxu0 0.0
    %1683 = vmatprep.subr.mxu0 0.0
    %1684 = vmatpush1.xpose.msra.mxu0 0.0
    %1685 = vmatprep.subr.mxu0 0.0
    %1686 = vmatpush1.xpose.msra.mxu0 0.0
    %1687 = vmatprep.subr.mxu0 0.0
    %1688 = vmatpush1.xpose.msra.mxu0 0.0
    %1689 = vmatprep.subr.mxu0 0.0
    %1690 = vmatpush1.xpose.msra.mxu0 0.0
    %1691 = vmatprep.subr.mxu0 0.0
    %1692 = vmatpush1.xpose.msra.mxu0 0.0
    %1693 = vmatprep.subr.mxu0 0.0
    %1694 = vmatpush1.xpose.msra.mxu0 0.0
    %1695 = vmatprep.subr.mxu0 0.0
    %1696 = vmatpush1.xpose.msra.mxu0 0.0
    %1697 = vmatprep.subr.mxu0 0.0
    %1698 = vmatpush1.xpose.msra.mxu0 0.0
    %1699 = vmatprep.subr.mxu0 0.0
    %1700 = vmatpush1.xpose.msra.mxu0 0.0
    %1701 = vmatprep.subr.mxu0 0.0
    %1702 = vmatpush1.xpose.msra.mxu0 0.0
    %1703 = vmatprep.mubr.f32.mxu0 0.0
    %1704 = vmatmul.mubr.f32.gmra.mrb[0].mxu0 %v1635
    %v1705 = vpop.f32.mrb[0].mxu0
    %v1706 = vadd.f32 0.0, %v1705
    %v1707 = vpop.f32.mrb[0].mxu0
    %1708 = vdwg.mxu0
    %1709 = vrot.lane.b32.xlu0 %v232, 104
    %v1710 = vpop.permute.xlu0 %1709
    %1711 = vrot.lane.b32.xlu0 %v311, 104
    %v1712 = vpop.permute.xlu0 %1711
    %v1713 = vsel %vm397, %v1710, 0
    %v1715 = vsel %vm397, %v1712, 0
    %1717 = vmatprep.subr.mxu0 0.0
    %1718 = vmatpush1.xpose.msra.mxu0 %v1715
    %1719 = vmatprep.subr.mxu0 0.0
    %1720 = vmatpush1.xpose.msra.mxu0 0.0
    %1721 = vmatprep.subr.mxu0 0.0
    %1722 = vmatpush1.xpose.msra.mxu0 0.0
    %1723 = vmatprep.subr.mxu0 0.0
    %1724 = vmatpush1.xpose.msra.mxu0 0.0
    %1725 = vmatprep.subr.mxu0 0.0
    %1726 = vmatpush1.xpose.msra.mxu0 0.0
    %1727 = vmatprep.subr.mxu0 0.0
    %1728 = vmatpush1.xpose.msra.mxu0 0.0
    %1729 = vmatprep.subr.mxu0 0.0
    %1730 = vmatpush1.xpose.msra.mxu0 0.0
    %1731 = vmatprep.subr.mxu0 0.0
    %1732 = vmatpush1.xpose.msra.mxu0 0.0
    %1733 = vmatprep.subr.mxu0 0.0
    %1734 = vmatpush1.xpose.msra.mxu0 0.0
    %1735 = vmatprep.subr.mxu0 0.0
    %1736 = vmatpush1.xpose.msra.mxu0 0.0
    %1737 = vmatprep.subr.mxu0 0.0
    %1738 = vmatpush1.xpose.msra.mxu0 0.0
    %1739 = vmatprep.subr.mxu0 0.0
    %1740 = vmatpush1.xpose.msra.mxu0 0.0
    %1741 = vmatprep.subr.mxu0 0.0
    %1742 = vmatpush1.xpose.msra.mxu0 0.0
    %1743 = vmatprep.subr.mxu0 0.0
    %1744 = vmatpush1.xpose.msra.mxu0 0.0
    %1745 = vmatprep.subr.mxu0 0.0
    %1746 = vmatpush1.xpose.msra.mxu0 0.0
    %1747 = vmatprep.subr.mxu0 0.0
    %1748 = vmatpush1.xpose.msra.mxu0 0.0
    %1749 = vmatprep.subr.mxu0 0.0
    %1750 = vmatpush1.xpose.msra.mxu0 0.0
    %1751 = vmatprep.subr.mxu0 0.0
    %1752 = vmatpush1.xpose.msra.mxu0 0.0
    %1753 = vmatprep.subr.mxu0 0.0
    %1754 = vmatpush1.xpose.msra.mxu0 0.0
    %1755 = vmatprep.subr.mxu0 0.0
    %1756 = vmatpush1.xpose.msra.mxu0 0.0
    %1757 = vmatprep.subr.mxu0 0.0
    %1758 = vmatpush1.xpose.msra.mxu0 0.0
    %1759 = vmatprep.subr.mxu0 0.0
    %1760 = vmatpush1.xpose.msra.mxu0 0.0
    %1761 = vmatprep.subr.mxu0 0.0
    %1762 = vmatpush1.xpose.msra.mxu0 0.0
    %1763 = vmatprep.subr.mxu0 0.0
    %1764 = vmatpush1.xpose.msra.mxu0 0.0
    %1765 = vmatprep.subr.mxu0 0.0
    %1766 = vmatpush1.xpose.msra.mxu0 0.0
    %1767 = vmatprep.subr.mxu0 0.0
    %1768 = vmatpush1.xpose.msra.mxu0 0.0
    %1769 = vmatprep.subr.mxu0 0.0
    %1770 = vmatpush1.xpose.msra.mxu0 0.0
    %1771 = vmatprep.subr.mxu0 0.0
    %1772 = vmatpush1.xpose.msra.mxu0 0.0
    %1773 = vmatprep.subr.mxu0 0.0
    %1774 = vmatpush1.xpose.msra.mxu0 0.0
    %1775 = vmatprep.subr.mxu0 0.0
    %1776 = vmatpush1.xpose.msra.mxu0 0.0
    %1777 = vmatprep.subr.mxu0 0.0
    %1778 = vmatpush1.xpose.msra.mxu0 0.0
    %1779 = vmatprep.subr.mxu0 0.0
    %1780 = vmatpush1.xpose.msra.mxu0 0.0
    %1781 = vmatprep.mubr.f32.mxu0 0.0
    %1782 = vmatmul.mubr.f32.gmra.mrb[0].mxu0 %v1713
    %v1783 = vpop.f32.mrb[0].mxu0
    %v1784 = vadd.f32 0.0, %v1783
    %v1785 = vpop.f32.mrb[0].mxu0
    %1786 = vdwg.mxu0
    %v1787 = vmul.f32 %v1706, 0.17677669
    %v1788 = vmul.f32 %v1784, 0.17677669
    %v1789 = vsel %vm397, %v1787, -inf
    %1790 = vmax.xlane.f32.xlu0 %v1789
    %v1791 = vpop.xlane.xlu0 %1790
    %v1792 = vsel %vm397, %v1788, -inf
    %1793 = vmax.xlane.f32.xlu0 %v1792
    %v1794 = vpop.xlane.xlu0 %1793
    %v1795 = vsub.f32 %v1787, %v1791
    %v1796 = vsub.f32 %v1788, %v1794
    %v1797 = vmul.f32 %v1795, 1.442695
    %v1798 = vpow.pop %v1797
    %v1799 = vmul.f32 %v1796, 1.442695
    %v1800 = vpow.pop %v1799
    %v1801 = vsel %vm397, %v1798, 0.0
    %1802 = vadd.xlane.f32.xlu0 %v1801
    %v1803 = vpop.xlane.xlu0 %1802
    %v1804 = vsel %vm397, %v1800, 0.0
    %1805 = vadd.xlane.f32.xlu0 %v1804
    %v1806 = vpop.xlane.xlu0 %1805
    %v1807 = vrcp.pop %v1803
    %v1808 = vrcp.pop %v1806
    %v1809 = vmul.f32 %v1798, %v1807
    %v1810 = vmul.f32 %v1800, %v1808
    %1811 = vrot.lane.b32.xlu0 %v385, 104
    %v1812 = vpop.permute.xlu0 %1811
    %v1815 = vsel %vm397, %v1809, 0
    %1817 = vmatprep.subr.mxu0 0.0
    %1818 = vmatpush1.msra.mxu0 %v1812
    %1819 = vmatprep.subr.mxu0 0.0
    %1820 = vmatpush1.msra.mxu0 0.0
    %1821 = vmatprep.subr.mxu0 0.0
    %1822 = vmatpush1.msra.mxu0 0.0
    %1823 = vmatprep.subr.mxu0 0.0
    %1824 = vmatpush1.msra.mxu0 0.0
    %1825 = vmatprep.subr.mxu0 0.0
    %1826 = vmatpush1.msra.mxu0 0.0
    %1827 = vmatprep.subr.mxu0 0.0
    %1828 = vmatpush1.msra.mxu0 0.0
    %1829 = vmatprep.subr.mxu0 0.0
    %1830 = vmatpush1.msra.mxu0 0.0
    %1831 = vmatprep.subr.mxu0 0.0
    %1832 = vmatpush1.msra.mxu0 0.0
    %1833 = vmatprep.subr.mxu0 0.0
    %1834 = vmatpush1.msra.mxu0 0.0
    %1835 = vmatprep.subr.mxu0 0.0
    %1836 = vmatpush1.msra.mxu0 0.0
    %1837 = vmatprep.subr.mxu0 0.0
    %1838 = vmatpush1.msra.mxu0 0.0
    %1839 = vmatprep.subr.mxu0 0.0
    %1840 = vmatpush1.msra.mxu0 0.0
    %1841 = vmatprep.subr.mxu0 0.0
    %1842 = vmatpush1.msra.mxu0 0.0
    %1843 = vmatprep.subr.mxu0 0.0
    %1844 = vmatpush1.msra.mxu0 0.0
    %1845 = vmatprep.subr.mxu0 0.0
    %1846 = vmatpush1.msra.mxu0 0.0
    %1847 = vmatprep.subr.mxu0 0.0
    %1848 = vmatpush1.msra.mxu0 0.0
    %1849 = vmatprep.subr.mxu0 0.0
    %1850 = vmatpush1.msra.mxu0 0.0
    %1851 = vmatprep.subr.mxu0 0.0
    %1852 = vmatpush1.msra.mxu0 0.0
    %1853 = vmatprep.subr.mxu0 0.0
    %1854 = vmatpush1.msra.mxu0 0.0
    %1855 = vmatprep.subr.mxu0 0.0
    %1856 = vmatpush1.msra.mxu0 0.0
    %1857 = vmatprep.subr.mxu0 0.0
    %1858 = vmatpush1.msra.mxu0 0.0
    %1859 = vmatprep.subr.mxu0 0.0
    %1860 = vmatpush1.msra.mxu0 0.0
    %1861 = vmatprep.subr.mxu0 0.0
    %1862 = vmatpush1.msra.mxu0 0.0
    %1863 = vmatprep.subr.mxu0 0.0
    %1864 = vmatpush1.msra.mxu0 0.0
    %1865 = vmatprep.subr.mxu0 0.0
    %1866 = vmatpush1.msra.mxu0 0.0
    %1867 = vmatprep.subr.mxu0 0.0
    %1868 = vmatpush1.msra.mxu0 0.0
    %1869 = vmatprep.subr.mxu0 0.0
    %1870 = vmatpush1.msra.mxu0 0.0
    %1871 = vmatprep.subr.mxu0 0.0
    %1872 = vmatpush1.msra.mxu0 0.0
    %1873 = vmatprep.subr.mxu0 0.0
    %1874 = vmatpush1.msra.mxu0 0.0
    %1875 = vmatprep.subr.mxu0 0.0
    %1876 = vmatpush1.msra.mxu0 0.0
    %1877 = vmatprep.subr.mxu0 0.0
    %1878 = vmatpush1.msra.mxu0 0.0
    %1879 = vmatprep.subr.mxu0 0.0
    %1880 = vmatpush1.msra.mxu0 0.0
    %1881 = vmatprep.mubr.f32.mxu0 0.0
    %1882 = vmatmul.mubr.f32.gmra.mrb[0].mxu0 %v1815
    %v1883 = vpop.f32.mrb[0].mxu0
    %v1884 = vadd.f32 0.0, %v1883
    %v1885 = vpop.f32.mrb[0].mxu0
    %1886 = vdwg.mxu0
    %1887 = vrot.lane.b32.xlu0 %v390, 104
    %v1888 = vpop.permute.xlu0 %1887
    %v1891 = vsel %vm397, %v1810, 0
    %1893 = vmatprep.subr.mxu0 0.0
    %1894 = vmatpush1.msra.mxu0 %v1888
    %1895 = vmatprep.subr.mxu0 0.0
    %1896 = vmatpush1.msra.mxu0 0.0
    %1897 = vmatprep.subr.mxu0 0.0
    %1898 = vmatpush1.msra.mxu0 0.0
    %1899 = vmatprep.subr.mxu0 0.0
    %1900 = vmatpush1.msra.mxu0 0.0
    %1901 = vmatprep.subr.mxu0 0.0
    %1902 = vmatpush1.msra.mxu0 0.0
    %1903 = vmatprep.subr.mxu0 0.0
    %1904 = vmatpush1.msra.mxu0 0.0
    %1905 = vmatprep.subr.mxu0 0.0
    %1906 = vmatpush1.msra.mxu0 0.0
    %1907 = vmatprep.subr.mxu0 0.0
    %1908 = vmatpush1.msra.mxu0 0.0
    %1909 = vmatprep.subr.mxu0 0.0
    %1910 = vmatpush1.msra.mxu0 0.0
    %1911 = vmatprep.subr.mxu0 0.0
    %1912 = vmatpush1.msra.mxu0 0.0
    %1913 = vmatprep.subr.mxu0 0.0
    %1914 = vmatpush1.msra.mxu0 0.0
    %1915 = vmatprep.subr.mxu0 0.0
    %1916 = vmatpush1.msra.mxu0 0.0
    %1917 = vmatprep.subr.mxu0 0.0
    %1918 = vmatpush1.msra.mxu0 0.0
    %1919 = vmatprep.subr.mxu0 0.0
    %1920 = vmatpush1.msra.mxu0 0.0
    %1921 = vmatprep.subr.mxu0 0.0
    %1922 = vmatpush1.msra.mxu0 0.0
    %1923 = vmatprep.subr.mxu0 0.0
    %1924 = vmatpush1.msra.mxu0 0.0
    %1925 = vmatprep.subr.mxu0 0.0
    %1926 = vmatpush1.msra.mxu0 0.0
    %1927 = vmatprep.subr.mxu0 0.0
    %1928 = vmatpush1.msra.mxu0 0.0
    %1929 = vmatprep.subr.mxu0 0.0
    %1930 = vmatpush1.msra.mxu0 0.0
    %1931 = vmatprep.subr.mxu0 0.0
    %1932 = vmatpush1.msra.mxu0 0.0
    %1933 = vmatprep.subr.mxu0 0.0
    %1934 = vmatpush1.msra.mxu0 0.0
    %1935 = vmatprep.subr.mxu0 0.0
    %1936 = vmatpush1.msra.mxu0 0.0
    %1937 = vmatprep.subr.mxu0 0.0
    %1938 = vmatpush1.msra.mxu0 0.0
    %1939 = vmatprep.subr.mxu0 0.0
    %1940 = vmatpush1.msra.mxu0 0.0
    %1941 = vmatprep.subr.mxu0 0.0
    %1942 = vmatpush1.msra.mxu0 0.0
    %1943 = vmatprep.subr.mxu0 0.0
    %1944 = vmatpush1.msra.mxu0 0.0
    %1945 = vmatprep.subr.mxu0 0.0
    %1946 = vmatpush1.msra.mxu0 0.0
    %1947 = vmatprep.subr.mxu0 0.0
    %1948 = vmatpush1.msra.mxu0 0.0
    %1949 = vmatprep.subr.mxu0 0.0
    %1950 = vmatpush1.msra.mxu0 0.0
    %1951 = vmatprep.subr.mxu0 0.0
    %1952 = vmatpush1.msra.mxu0 0.0
    %1953 = vmatprep.subr.mxu0 0.0
    %1954 = vmatpush1.msra.mxu0 0.0
    %1955 = vmatprep.subr.mxu0 0.0
    %1956 = vmatpush1.msra.mxu0 0.0
    %1957 = vmatprep.mubr.f32.mxu0 0.0
    %1958 = vmatmul.mubr.f32.gmra.mrb[0].mxu0 %v1891
    %v1959 = vpop.f32.mrb[0].mxu0
    %v1960 = vadd.f32 0.0, %v1959
    %v1961 = vpop.f32.mrb[0].mxu0
    %1962 = vdwg.mxu0
    %v1964 = vsel %vm397, %v1884, 0
    %v1967 = vsel %vm397, %v1960, 0
    %1969 = vmatprep.subr.mxu0 0.0
    %1970 = vmatpush1.msra.mxu0 %v396
    %1971 = vmatprep.subr.mxu0 0.0
    %1972 = vmatpush1.msra.mxu0 0.0
    %1973 = vmatprep.subr.mxu0 0.0
    %1974 = vmatpush1.msra.mxu0 0.0
    %1975 = vmatprep.subr.mxu0 0.0
    %1976 = vmatpush1.msra.mxu0 0.0
    %1977 = vmatprep.subr.mxu0 0.0
    %1978 = vmatpush1.msra.mxu0 0.0
    %1979 = vmatprep.subr.mxu0 0.0
    %1980 = vmatpush1.msra.mxu0 0.0
    %1981 = vmatprep.subr.mxu0 0.0
    %1982 = vmatpush1.msra.mxu0 0.0
    %1983 = vmatprep.subr.mxu0 0.0
    %1984 = vmatpush1.msra.mxu0 0.0
    %1985 = vmatprep.subr.mxu0 0.0
    %1986 = vmatpush1.msra.mxu0 0.0
    %1987 = vmatprep.subr.mxu0 0.0
    %1988 = vmatpush1.msra.mxu0 0.0
    %1989 = vmatprep.subr.mxu0 0.0
    %1990 = vmatpush1.msra.mxu0 0.0
    %1991 = vmatprep.subr.mxu0 0.0
    %1992 = vmatpush1.msra.mxu0 0.0
    %1993 = vmatprep.subr.mxu0 0.0
    %1994 = vmatpush1.msra.mxu0 0.0
    %1995 = vmatprep.subr.mxu0 0.0
    %1996 = vmatpush1.msra.mxu0 0.0
    %1997 = vmatprep.subr.mxu0 0.0
    %1998 = vmatpush1.msra.mxu0 0.0
    %1999 = vmatprep.subr.mxu0 0.0
    %2000 = vmatpush1.msra.mxu0 0.0
    %2001 = vmatprep.subr.mxu0 0.0
    %2002 = vmatpush1.msra.mxu0 0.0
    %2003 = vmatprep.subr.mxu0 0.0
    %2004 = vmatpush1.msra.mxu0 0.0
    %2005 = vmatprep.subr.mxu0 0.0
    %2006 = vmatpush1.msra.mxu0 0.0
    %2007 = vmatprep.subr.mxu0 0.0
    %2008 = vmatpush1.msra.mxu0 0.0
    %2009 = vmatprep.subr.mxu0 0.0
    %2010 = vmatpush1.msra.mxu0 0.0
    %2011 = vmatprep.subr.mxu0 0.0
    %2012 = vmatpush1.msra.mxu0 0.0
    %2013 = vmatprep.subr.mxu0 0.0
    %2014 = vmatpush1.msra.mxu0 0.0
    %2015 = vmatprep.subr.mxu0 0.0
    %2016 = vmatpush1.msra.mxu0 0.0
    %2017 = vmatprep.subr.mxu0 0.0
    %2018 = vmatpush1.msra.mxu0 0.0
    %2019 = vmatprep.subr.mxu0 0.0
    %2020 = vmatpush1.msra.mxu0 0.0
    %2021 = vmatprep.subr.mxu0 0.0
    %2022 = vmatpush1.msra.mxu0 0.0
    %2023 = vmatprep.subr.mxu0 0.0
    %2024 = vmatpush1.msra.mxu0 0.0
    %2025 = vmatprep.subr.mxu0 0.0
    %2026 = vmatpush1.msra.mxu0 0.0
    %2027 = vmatprep.subr.mxu0 0.0
    %2028 = vmatpush1.msra.mxu0 0.0
    %2029 = vmatprep.subr.mxu0 0.0
    %2030 = vmatpush1.msra.mxu0 0.0
    %2031 = vmatprep.subr.mxu0 0.0
    %2032 = vmatpush1.msra.mxu0 0.0
    %2033 = vmatprep.mubr.f32.mxu0 0.0
    %2034 = vmatmul.mubr.f32.gmra.mrb[0].mxu0 %v1964
    %v2035 = vpop.f32.mrb[0].mxu0
    %v2036 = vadd.f32 0.0, %v2035
    %v2037 = vpop.f32.mrb[0].mxu0
    %2038 = vmatprep.mubr.f32.mxu0 0.0
    %2039 = vmatmul.mubr.f32.gmra.mrb[0].mxu0 %v1967
    %v2040 = vpop.f32.mrb[0].mxu0
    %v2041 = vadd.f32 0.0, %v2040
    %v2042 = vpop.f32.mrb[0].mxu0
    %2043 = vdwg.mxu0
    %v2044 = vadd.f32 %v1629, %v2036
    %v2045 = vadd.f32 %v1630, %v2041
    %v2046 = vlaneseq
    %v2047 = vshrl.u32 %v2046, 7
    %v2048 = vsub.s32 0, %v2047
    %v2049 = vrot.slane %v39, %v2048
    %v2050 = vadd.f32 %v2044, %v2049
    %v2051 = vadd.f32 %v2045, %v2049
    %v2052 = vadd.f32 %v147, %v2050
    %v2053 = vadd.f32 %v148, %v2051
    %v2054 = vsel %vm153, %v2052, 0.0
    %2055 = vadd.xlane.f32.xlu0 %v2054
    %v2056 = vpop.xlane.xlu0 %2055
    %v2057 = vsel %vm153, %v2053, 0.0
    %2058 = vadd.xlane.f32.xlu0 %v2057
    %v2059 = vpop.xlane.xlu0 %2058
    %v2060 = vrcp.pop 32.0
    %v2061 = vmul.f32 %v2056, %v2060
    %v2062 = vmul.f32 %v2059, %v2060
    %v2063 = vsub.f32 %v2052, %v2061
    %v2064 = vsub.f32 %v2053, %v2062
    %v2065 = vmul.f32 %v2063, %v2063
    %v2066 = vmul.f32 %v2064, %v2064
    %v2067 = vsel %vm153, %v2065, 0.0
    %2068 = vadd.xlane.f32.xlu0 %v2067
    %v2069 = vpop.xlane.xlu0 %2068
    %v2070 = vsel %vm153, %v2066, 0.0
    %2071 = vadd.xlane.f32.xlu0 %v2070
    %v2072 = vpop.xlane.xlu0 %2071
    %v2073 = vmul.f32 %v2069, %v2060
    %v2074 = vmul.f32 %v2072, %v2060
    %v2075 = vadd.f32 %v2073, 1e-05
    %v2076 = vadd.f32 %v2074, 1e-05
    %v2077 = vrsqrt.pop %v2075
    %v2078 = vrsqrt.pop %v2076
    %v2079 = vmul.f32 %v2063, %v2077
    %v2080 = vmul.f32 %v2064, %v2078
    %v2081 = vlaneseq
    %v2082 = vshrl.u32 %v2081, 7
    %v2083 = vsub.s32 3, %v2082
    %v2084 = vrot.slane %v39, %v2083
    %v2085 = vmul.f32 %v2079, %v2084
    %v2086 = vmul.f32 %v2080, %v2084
    %v2087 = vlaneseq
    %v2088 = vshrl.u32 %v2087, 7
    %v2089 = vsub.s32 4, %v2088
    %v2090 = vrot.slane %v39, %v2089
    %v2091 = vadd.f32 %v2085, %v2090
    %v2092 = vadd.f32 %v2086, %v2090
    %v2093 = vld [vmem:[%s7] sm:$0xff]
    %v2094 = vld [vmem:[%s7 + $0x8] sm:$0xff]
    %v2095 = vld [vmem:[%s7 + $0x10] sm:$0xff]
    %v2096 = vld [vmem:[%s7 + $0x18] sm:$0xff]
    %v2097 = vlaneseq
    %v2098 = vshrl.u32 %v2097, 7
    %v2099 = vsub.s32 1, %v2098
    %v2100 = vrot.slane %v39, %v2099
    %v2102 = vsel %vm153, %v2091, 0
    %v2105 = vsel %vm153, %v2092, 0
    %2107 = vmatprep.subr.mxu0 0.0
    %2108 = vmatpush1.msra.mxu0 %v2093
    %2109 = vmatprep.subr.mxu0 0.0
    %2110 = vmatpush1.msra.mxu0 %v2094
    %2111 = vmatprep.subr.mxu0 0.0
    %2112 = vmatpush1.msra.mxu0 %v2095
    %2113 = vmatprep.subr.mxu0 0.0
    %2114 = vmatpush1.msra.mxu0 %v2096
    %2115 = vmatprep.subr.mxu0 0.0
    %2116 = vmatpush1.msra.mxu0 0.0
    %2117 = vmatprep.subr.mxu0 0.0
    %2118 = vmatpush1.msra.mxu0 0.0
    %2119 = vmatprep.subr.mxu0 0.0
    %2120 = vmatpush1.msra.mxu0 0.0
    %2121 = vmatprep.subr.mxu0 0.0
    %2122 = vmatpush1.msra.mxu0 0.0
    %2123 = vmatprep.subr.mxu0 0.0
    %2124 = vmatpush1.msra.mxu0 0.0
    %2125 = vmatprep.subr.mxu0 0.0
    %2126 = vmatpush1.msra.mxu0 0.0
    %2127 = vmatprep.subr.mxu0 0.0
    %2128 = vmatpush1.msra.mxu0 0.0
    %2129 = vmatprep.subr.mxu0 0.0
    %2130 = vmatpush1.msra.mxu0 0.0
    %2131 = vmatprep.subr.mxu0 0.0
    %2132 = vmatpush1.msra.mxu0 0.0
    %2133 = vmatprep.subr.mxu0 0.0
    %2134 = vmatpush1.msra.mxu0 0.0
    %2135 = vmatprep.subr.mxu0 0.0
    %2136 = vmatpush1.msra.mxu0 0.0
    %2137 = vmatprep.subr.mxu0 0.0
    %2138 = vmatpush1.msra.mxu0 0.0
    %2139 = vmatprep.subr.mxu0 0.0
    %2140 = vmatpush1.msra.mxu0 0.0
    %2141 = vmatprep.subr.mxu0 0.0
    %2142 = vmatpush1.msra.mxu0 0.0
    %2143 = vmatprep.subr.mxu0 0.0
    %2144 = vmatpush1.msra.mxu0 0.0
    %2145 = vmatprep.subr.mxu0 0.0
    %2146 = vmatpush1.msra.mxu0 0.0
    %2147 = vmatprep.subr.mxu0 0.0
    %2148 = vmatpush1.msra.mxu0 0.0
    %2149 = vmatprep.subr.mxu0 0.0
    %2150 = vmatpush1.msra.mxu0 0.0
    %2151 = vmatprep.subr.mxu0 0.0
    %2152 = vmatpush1.msra.mxu0 0.0
    %2153 = vmatprep.subr.mxu0 0.0
    %2154 = vmatpush1.msra.mxu0 0.0
    %2155 = vmatprep.subr.mxu0 0.0
    %2156 = vmatpush1.msra.mxu0 0.0
    %2157 = vmatprep.subr.mxu0 0.0
    %2158 = vmatpush1.msra.mxu0 0.0
    %2159 = vmatprep.subr.mxu0 0.0
    %2160 = vmatpush1.msra.mxu0 0.0
    %2161 = vmatprep.subr.mxu0 0.0
    %2162 = vmatpush1.msra.mxu0 0.0
    %2163 = vmatprep.subr.mxu0 0.0
    %2164 = vmatpush1.msra.mxu0 0.0
    %2165 = vmatprep.subr.mxu0 0.0
    %2166 = vmatpush1.msra.mxu0 0.0
    %2167 = vmatprep.subr.mxu0 0.0
    %2168 = vmatpush1.msra.mxu0 0.0
    %2169 = vmatprep.subr.mxu0 0.0
    %2170 = vmatpush1.msra.mxu0 0.0
    %2171 = vmatprep.mubr.f32.mxu0 0.0
    %2172 = vmatmul.mubr.f32.gmra.mrb[0].mxu0 %v2102
    %v2173 = vpop.f32.mrb[0].mxu0
    %v2174 = vadd.f32 %v2100, %v2173
    %v2175 = vpop.f32.mrb[0].mxu0
    %2176 = vmatprep.mubr.f32.mxu0 0.0
    %2177 = vmatmul.mubr.f32.gmra.mrb[0].mxu0 %v2105
    %v2178 = vpop.f32.mrb[0].mxu0
    %v2179 = vadd.f32 %v2100, %v2178
    %v2180 = vpop.f32.mrb[0].mxu0
    %2181 = vdwg.mxu0
    %v2182 = vmax.f32 %v2174, 0.0
    %v2183 = vmax.f32 %v2179, 0.0
    %v2184 = vld [vmem:[%s8] sm:$0xff]
    %v2185 = vld [vmem:[%s8 + $0x8] sm:$0xff]
    %v2186 = vld [vmem:[%s8 + $0x10] sm:$0xff]
    %v2187 = vld [vmem:[%s8 + $0x18] sm:$0xff]
    %v2188 = vld [vmem:[%s8 + $0x20] sm:$0xff]
    %v2189 = vld [vmem:[%s8 + $0x28] sm:$0xff]
    %v2190 = vld [vmem:[%s8 + $0x30] sm:$0xff]
    %v2191 = vld [vmem:[%s8 + $0x38] sm:$0xff]
    %v2192 = vld [vmem:[%s8 + $0x40] sm:$0xff]
    %v2193 = vld [vmem:[%s8 + $0x48] sm:$0xff]
    %v2194 = vld [vmem:[%s8 + $0x50] sm:$0xff]
    %v2195 = vld [vmem:[%s8 + $0x58] sm:$0xff]
    %v2196 = vld [vmem:[%s8 + $0x60] sm:$0xff]
    %v2197 = vld [vmem:[%s8 + $0x68] sm:$0xff]
    %v2198 = vld [vmem:[%s8 + $0x70] sm:$0xff]
    %v2199 = vld [vmem:[%s8 + $0x78] sm:$0xff]
    %v2200 = vlaneseq
    %v2201 = vshrl.u32 %v2200, 7
    %v2202 = vsub.s32 2, %v2201
    %v2203 = vrot.slane %v39, %v2202
    %2204 = vmatprep.subr.mxu0 0.0
    %2205 = vmatpush1.msra.mxu0 %v2184
    %2206 = vmatprep.subr.mxu0 0.0
    %2207 = vmatpush1.msra.mxu0 %v2185
    %2208 = vmatprep.subr.mxu0 0.0
    %2209 = vmatpush1.msra.mxu0 %v2186
    %2210 = vmatprep.subr.mxu0 0.0
    %2211 = vmatpush1.msra.mxu0 %v2187
    %2212 = vmatprep.subr.mxu0 0.0
    %2213 = vmatpush1.msra.mxu0 %v2188
    %2214 = vmatprep.subr.mxu0 0.0
    %2215 = vmatpush1.msra.mxu0 %v2189
    %2216 = vmatprep.subr.mxu0 0.0
    %2217 = vmatpush1.msra.mxu0 %v2190
    %2218 = vmatprep.subr.mxu0 0.0
    %2219 = vmatpush1.msra.mxu0 %v2191
    %2220 = vmatprep.subr.mxu0 0.0
    %2221 = vmatpush1.msra.mxu0 %v2192
    %2222 = vmatprep.subr.mxu0 0.0
    %2223 = vmatpush1.msra.mxu0 %v2193
    %2224 = vmatprep.subr.mxu0 0.0
    %2225 = vmatpush1.msra.mxu0 %v2194
    %2226 = vmatprep.subr.mxu0 0.0
    %2227 = vmatpush1.msra.mxu0 %v2195
    %2228 = vmatprep.subr.mxu0 0.0
    %2229 = vmatpush1.msra.mxu0 %v2196
    %2230 = vmatprep.subr.mxu0 0.0
    %2231 = vmatpush1.msra.mxu0 %v2197
    %2232 = vmatprep.subr.mxu0 0.0
    %2233 = vmatpush1.msra.mxu0 %v2198
    %2234 = vmatprep.subr.mxu0 0.0
    %2235 = vmatpush1.msra.mxu0 %v2199
    %2236 = vmatprep.subr.mxu0 0.0
    %2237 = vmatpush1.msra.mxu0 0.0
    %2238 = vmatprep.subr.mxu0 0.0
    %2239 = vmatpush1.msra.mxu0 0.0
    %2240 = vmatprep.subr.mxu0 0.0
    %2241 = vmatpush1.msra.mxu0 0.0
    %2242 = vmatprep.subr.mxu0 0.0
    %2243 = vmatpush1.msra.mxu0 0.0
    %2244 = vmatprep.subr.mxu0 0.0
    %2245 = vmatpush1.msra.mxu0 0.0
    %2246 = vmatprep.subr.mxu0 0.0
    %2247 = vmatpush1.msra.mxu0 0.0
    %2248 = vmatprep.subr.mxu0 0.0
    %2249 = vmatpush1.msra.mxu0 0.0
    %2250 = vmatprep.subr.mxu0 0.0
    %2251 = vmatpush1.msra.mxu0 0.0
    %2252 = vmatprep.subr.mxu0 0.0
    %2253 = vmatpush1.msra.mxu0 0.0
    %2254 = vmatprep.subr.mxu0 0.0
    %2255 = vmatpush1.msra.mxu0 0.0
    %2256 = vmatprep.subr.mxu0 0.0
    %2257 = vmatpush1.msra.mxu0 0.0
    %2258 = vmatprep.subr.mxu0 0.0
    %2259 = vmatpush1.msra.mxu0 0.0
    %2260 = vmatprep.subr.mxu0 0.0
    %2261 = vmatpush1.msra.mxu0 0.0
    %2262 = vmatprep.subr.mxu0 0.0
    %2263 = vmatpush1.msra.mxu0 0.0
    %2264 = vmatprep.subr.mxu0 0.0
    %2265 = vmatpush1.msra.mxu0 0.0
    %2266 = vmatprep.subr.mxu0 0.0
    %2267 = vmatpush1.msra.mxu0 0.0
    %2268 = vmatprep.mubr.f32.mxu0 0.0
    %2269 = vmatmul.mubr.f32.gmra.mrb[0].mxu0 %v2182
    %v2270 = vpop.f32.mrb[0].mxu0
    %v2271 = vadd.f32 %v2203, %v2270
    %v2272 = vpop.f32.mrb[0].mxu0
    %2273 = vmatprep.mubr.f32.mxu0 0.0
    %2274 = vmatmul.mubr.f32.gmra.mrb[0].mxu0 %v2183
    %v2275 = vpop.f32.mrb[0].mxu0
    %v2276 = vadd.f32 %v2203, %v2275
    %v2277 = vpop.f32.mrb[0].mxu0
    %2278 = vdwg.mxu0
    %v2279 = vadd.f32 %v2091, %v2271
    %v2280 = vadd.f32 %v2092, %v2276
    %v2281 = vsel %vm153, %v2279, 0.0
    %2282 = vadd.xlane.f32.xlu0 %v2281
    %v2283 = vpop.xlane.xlu0 %2282
    %v2284 = vsel %vm153, %v2280, 0.0
    %2285 = vadd.xlane.f32.xlu0 %v2284
    %v2286 = vpop.xlane.xlu0 %2285
    %v2287 = vmul.f32 %v2283, %v2060
    %v2288 = vmul.f32 %v2286, %v2060
    %v2289 = vsub.f32 %v2279, %v2287
    %v2290 = vsub.f32 %v2280, %v2288
    %v2291 = vmul.f32 %v2289, %v2289
    %v2292 = vmul.f32 %v2290, %v2290
    %v2293 = vsel %vm153, %v2291, 0.0
    %2294 = vadd.xlane.f32.xlu0 %v2293
    %v2295 = vpop.xlane.xlu0 %2294
    %v2296 = vsel %vm153, %v2292, 0.0
    %2297 = vadd.xlane.f32.xlu0 %v2296
    %v2298 = vpop.xlane.xlu0 %2297
    %v2299 = vmul.f32 %v2295, %v2060
    %v2300 = vmul.f32 %v2298, %v2060
    %v2301 = vadd.f32 %v2299, 1e-05
    %v2302 = vadd.f32 %v2300, 1e-05
    %v2303 = vrsqrt.pop %v2301
    %v2304 = vrsqrt.pop %v2302
    %v2305 = vmul.f32 %v2289, %v2303
    %v2306 = vmul.f32 %v2290, %v2304
    %v2307 = vlaneseq
    %v2308 = vshrl.u32 %v2307, 7
    %v2309 = vsub.s32 5, %v2308
    %v2310 = vrot.slane %v39, %v2309
    %v2311 = vmul.f32 %v2305, %v2310
    %v2312 = vmul.f32 %v2306, %v2310
    %v2313 = vlaneseq
    %v2314 = vshrl.u32 %v2313, 7
    %v2315 = vsub.s32 6, %v2314
    %v2316 = vrot.slane %v39, %v2315
    %v2317 = vadd.f32 %v2311, %v2316
    %v2318 = vadd.f32 %v2312, %v2316
    %v2319 = vlaneseq
    %v2320 = vshrl.u32 %v2319, 7
    %v2321 = vmul.u32 %v2320, 8
    %vm2322 = vcmp.ge.s32.totalorder %v43, %v2321
    %v2323 = vadd.s32 %v2320, 1
    %v2324 = vmul.u32 %v2323, 8
    %vm2325 = vcmp.lt.s32.totalorder %v43, %v2324
    %vm2326 = vmand %vm2322, %vm2325
    %v2327 = vsel %vm2326, 0.125, 0.0
    %vm2328 = vcmask 130048
    %v2330 = vsel %vm2328, %v2327, 0
    %2332 = vmatprep.subr.mxu0 0.0
    %2333 = vmatpush1.msra.mxu0 %v2317
    %2334 = vmatprep.subr.mxu0 0.0
    %2335 = vmatpush1.msra.mxu0 %v2318
    %2336 = vmatprep.subr.mxu0 0.0
    %2337 = vmatpush1.msra.mxu0 0.0
    %2338 = vmatprep.subr.mxu0 0.0
    %2339 = vmatpush1.msra.mxu0 0.0
    %2340 = vmatprep.subr.mxu0 0.0
    %2341 = vmatpush1.msra.mxu0 0.0
    %2342 = vmatprep.subr.mxu0 0.0
    %2343 = vmatpush1.msra.mxu0 0.0
    %2344 = vmatprep.subr.mxu0 0.0
    %2345 = vmatpush1.msra.mxu0 0.0
    %2346 = vmatprep.subr.mxu0 0.0
    %2347 = vmatpush1.msra.mxu0 0.0
    %2348 = vmatprep.subr.mxu0 0.0
    %2349 = vmatpush1.msra.mxu0 0.0
    %2350 = vmatprep.subr.mxu0 0.0
    %2351 = vmatpush1.msra.mxu0 0.0
    %2352 = vmatprep.subr.mxu0 0.0
    %2353 = vmatpush1.msra.mxu0 0.0
    %2354 = vmatprep.subr.mxu0 0.0
    %2355 = vmatpush1.msra.mxu0 0.0
    %2356 = vmatprep.subr.mxu0 0.0
    %2357 = vmatpush1.msra.mxu0 0.0
    %2358 = vmatprep.subr.mxu0 0.0
    %2359 = vmatpush1.msra.mxu0 0.0
    %2360 = vmatprep.subr.mxu0 0.0
    %2361 = vmatpush1.msra.mxu0 0.0
    %2362 = vmatprep.subr.mxu0 0.0
    %2363 = vmatpush1.msra.mxu0 0.0
    %2364 = vmatprep.subr.mxu0 0.0
    %2365 = vmatpush1.msra.mxu0 0.0
    %2366 = vmatprep.subr.mxu0 0.0
    %2367 = vmatpush1.msra.mxu0 0.0
    %2368 = vmatprep.subr.mxu0 0.0
    %2369 = vmatpush1.msra.mxu0 0.0
    %2370 = vmatprep.subr.mxu0 0.0
    %2371 = vmatpush1.msra.mxu0 0.0
    %2372 = vmatprep.subr.mxu0 0.0
    %2373 = vmatpush1.msra.mxu0 0.0
    %2374 = vmatprep.subr.mxu0 0.0
    %2375 = vmatpush1.msra.mxu0 0.0
    %2376 = vmatprep.subr.mxu0 0.0
    %2377 = vmatpush1.msra.mxu0 0.0
    %2378 = vmatprep.subr.mxu0 0.0
    %2379 = vmatpush1.msra.mxu0 0.0
    %2380 = vmatprep.subr.mxu0 0.0
    %2381 = vmatpush1.msra.mxu0 0.0
    %2382 = vmatprep.subr.mxu0 0.0
    %2383 = vmatpush1.msra.mxu0 0.0
    %2384 = vmatprep.subr.mxu0 0.0
    %2385 = vmatpush1.msra.mxu0 0.0
    %2386 = vmatprep.subr.mxu0 0.0
    %2387 = vmatpush1.msra.mxu0 0.0
    %2388 = vmatprep.subr.mxu0 0.0
    %2389 = vmatpush1.msra.mxu0 0.0
    %2390 = vmatprep.subr.mxu0 0.0
    %2391 = vmatpush1.msra.mxu0 0.0
    %2392 = vmatprep.subr.mxu0 0.0
    %2393 = vmatpush1.msra.mxu0 0.0
    %2394 = vmatprep.subr.mxu0 0.0
    %2395 = vmatpush1.msra.mxu0 0.0
    %2396 = vmatprep.mubr.f32.mxu0 0.0
    %2397 = vmatmul.mubr.f32.gmra.mrb[0].mxu0 %v2330
    %v2398 = vpop.f32.mrb[0].mxu0
    %v2399 = vadd.f32 0.0, %v2398
    %v2400 = vpop.f32.mrb[0].mxu0
    %2401 = vdwg.mxu0
    %v2402 = vld [vmem:[%s9] sm:$0xff]
    %v2403 = vld [vmem:[%s9 + $0x8] sm:$0xff]
    %v2404 = vld [vmem:[%s9 + $0x10] sm:$0xff]
    %v2405 = vld [vmem:[%s9 + $0x18] sm:$0xff]
    %v2406 = vlaneseq
    %v2407 = vshrl.u32 %v2406, 7
    %v2408 = vsub.s32 7, %v2407
    %v2409 = vrot.slane %v39, %v2408
    %v2411 = vsel %vm153, %v2399, 0
    %2413 = vmatprep.subr.mxu0 0.0
    %2414 = vmatpush1.msra.mxu0 %v2402
    %2415 = vmatprep.subr.mxu0 0.0
    %2416 = vmatpush1.msra.mxu0 %v2403
    %2417 = vmatprep.subr.mxu0 0.0
    %2418 = vmatpush1.msra.mxu0 %v2404
    %2419 = vmatprep.subr.mxu0 0.0
    %2420 = vmatpush1.msra.mxu0 %v2405
    %2421 = vmatprep.subr.mxu0 0.0
    %2422 = vmatpush1.msra.mxu0 0.0
    %2423 = vmatprep.subr.mxu0 0.0
    %2424 = vmatpush1.msra.mxu0 0.0
    %2425 = vmatprep.subr.mxu0 0.0
    %2426 = vmatpush1.msra.mxu0 0.0
    %2427 = vmatprep.subr.mxu0 0.0
    %2428 = vmatpush1.msra.mxu0 0.0
    %2429 = vmatprep.subr.mxu0 0.0
    %2430 = vmatpush1.msra.mxu0 0.0
    %2431 = vmatprep.subr.mxu0 0.0
    %2432 = vmatpush1.msra.mxu0 0.0
    %2433 = vmatprep.subr.mxu0 0.0
    %2434 = vmatpush1.msra.mxu0 0.0
    %2435 = vmatprep.subr.mxu0 0.0
    %2436 = vmatpush1.msra.mxu0 0.0
    %2437 = vmatprep.subr.mxu0 0.0
    %2438 = vmatpush1.msra.mxu0 0.0
    %2439 = vmatprep.subr.mxu0 0.0
    %2440 = vmatpush1.msra.mxu0 0.0
    %2441 = vmatprep.subr.mxu0 0.0
    %2442 = vmatpush1.msra.mxu0 0.0
    %2443 = vmatprep.subr.mxu0 0.0
    %2444 = vmatpush1.msra.mxu0 0.0
    %2445 = vmatprep.subr.mxu0 0.0
    %2446 = vmatpush1.msra.mxu0 0.0
    %2447 = vmatprep.subr.mxu0 0.0
    %2448 = vmatpush1.msra.mxu0 0.0
    %2449 = vmatprep.subr.mxu0 0.0
    %2450 = vmatpush1.msra.mxu0 0.0
    %2451 = vmatprep.subr.mxu0 0.0
    %2452 = vmatpush1.msra.mxu0 0.0
    %2453 = vmatprep.subr.mxu0 0.0
    %2454 = vmatpush1.msra.mxu0 0.0
    %2455 = vmatprep.subr.mxu0 0.0
    %2456 = vmatpush1.msra.mxu0 0.0
    %2457 = vmatprep.subr.mxu0 0.0
    %2458 = vmatpush1.msra.mxu0 0.0
    %2459 = vmatprep.subr.mxu0 0.0
    %2460 = vmatpush1.msra.mxu0 0.0
    %2461 = vmatprep.subr.mxu0 0.0
    %2462 = vmatpush1.msra.mxu0 0.0
    %2463 = vmatprep.subr.mxu0 0.0
    %2464 = vmatpush1.msra.mxu0 0.0
    %2465 = vmatprep.subr.mxu0 0.0
    %2466 = vmatpush1.msra.mxu0 0.0
    %2467 = vmatprep.subr.mxu0 0.0
    %2468 = vmatpush1.msra.mxu0 0.0
    %2469 = vmatprep.subr.mxu0 0.0
    %2470 = vmatpush1.msra.mxu0 0.0
    %2471 = vmatprep.subr.mxu0 0.0
    %2472 = vmatpush1.msra.mxu0 0.0
    %2473 = vmatprep.subr.mxu0 0.0
    %2474 = vmatpush1.msra.mxu0 0.0
    %2475 = vmatprep.subr.mxu0 0.0
    %2476 = vmatpush1.msra.mxu0 0.0
    %2477 = vmatprep.mubr.f32.mxu0 0.0
    %2478 = vmatmul.mubr.f32.gmra.mrb[0].mxu0 %v2411
    %v2479 = vpop.f32.mrb[0].mxu0
    %v2480 = vadd.f32 %v2409, %v2479
    %v2481 = vpop.f32.mrb[0].mxu0
    %2482 = vdwg.mxu0
    %vm2483 = vcmask 25600
    %2484 = vst.msk [vmem:[#allocation2] sm:$0x3] %vm2483, %v2480
    // Predicated region
    $region46: #{encoder_transformer_pallas.1} parent=1 // pred_check
      _
    $region47: #{encoder_transformer_pallas.1} parent=1 // pred_check_branch
      %2486 = sbr.rel (0) target = $region49
    $region48: #{encoder_transformer_pallas.1} parent=1 // pred_region
      %s2488 = ssub.s32 32, 32
      %2489 = vsyncadd [#allocation3], %s2488
      %s2491 = sshll.u32 [#allocation2], 4
      %s2492 = int_to_ptr.vmem [resolvable:$true] %s2491
      %2494 = dma.vmem_to_hbm [thread:$0]  %s2492, 32, %s11, [#allocation3]
    $region49: #{encoder_transformer_pallas.1} parent=1 // pred_fallthru
      _
    // Predicated region
    $region50: #{encoder_transformer_pallas.1} parent=1 // pred_check
      _
    $region51: #{encoder_transformer_pallas.1} parent=1 // pred_check_branch
      %2496 = sbr.rel (0) target = $region53
    $region52: #{encoder_transformer_pallas.1} parent=1 // pred_region
      %2497 = dma.done [#allocation3], 32
    $region53: #{encoder_transformer_pallas.1} parent=1 // pred_fallthru
      _
    %2498 = vsyncpa [#allocation3], 1

</llo_original>
